<compile_context>
chip_gen: v5e
topology: v5e:2x2
jax: 0.10.0
libtpu: 0.0.40
codegen_flags: <defaults>
</compile_context>

<pallas_src>
import jax
import jax.numpy as jnp
from jax import lax
from jax.experimental import pallas as pl
from jax.experimental.pallas import tpu as pltpu


# ----------------------------------------------------------------------------
# Pallas kernel: conv3x3 -> BN -> ReLU -> conv3x3 -> BN -> ReLU, + residual 1x1 conv
# on lane-dense (N*H, W*C) activations, convolutions as banded matmuls.
# ----------------------------------------------------------------------------
def _decoder_block_kernel(x_ref,                     # (NH, W*Cc)   lane-dense concat input
                          band1_ref,                 # (3, W*Cc, W*Co)  conv1 bands (per ky)
                          band2_ref,                 # (3, W*Co, W*Co)  conv2 bands (per ky)
                          bandr_ref,                 # (W*Cc, W*Co)     residual 1x1 band
                          sdn_ref, sup_ref,          # (NH, NH) row-shift matrices (ky=0 / ky=2)
                          fold_ref,                  # (W*Co, Co)   lane -> channel fold
                          bcast_ref,                 # (Co, W*Co)   channel -> lane broadcast
                          b1_ref, g1_ref, bt1_ref,   # (1, W*Co), (1, Co), (1, Co)
                          b2_ref, g2_ref, bt2_ref,   # (1, W*Co), (1, Co), (1, Co)
                          brv_ref,                   # (1, W*Co)
                          out_ref):                  # (NH, W*Co)
    f32 = jnp.float32
    nh, lanes = out_ref.shape
    co = g1_ref.shape[1]
    w = lanes // co
    cnt = f32(nh * w)            # N*H*W elements per channel for batch statistics
    eps = f32(1e-5)

    x = x_ref[...]
    sdn = sdn_ref[...]
    sup = sup_ref[...]
    fold = fold_ref[...]
    bcast = bcast_ref[...]

    def band_conv3x3(inp, band_ref, bias_v):
        # One K-dense matmul per kernel row ky; width padding is baked into the bands.
        y0 = jnp.dot(inp, band_ref[0], preferred_element_type=f32)
        y1 = jnp.dot(inp, band_ref[1], preferred_element_type=f32)
        y2 = jnp.dot(inp, band_ref[2], preferred_element_type=f32)
        # ky = 0 / 2 need the previous / next image row; the shift matrices also zero rows that
        # would cross an image (height-padding) boundary -> no padded scratch buffer needed.
        return (y1
                + jnp.dot(sdn, y0, preferred_element_type=f32)
                + jnp.dot(sup, y2, preferred_element_type=f32)
                + bias_v)

    def bn_relu(acc, g, bt):
        # Training-mode BatchNorm, single pass: per-lane sums -> per-channel via fold matmul.
        s1 = jnp.dot(jnp.sum(acc, axis=0, keepdims=True), fold,
                     preferred_element_type=f32)                         # (1, Co)
        s2 = jnp.dot(jnp.sum(acc * acc, axis=0, keepdims=True), fold,
                     preferred_element_type=f32)                         # (1, Co)
        mean = s1 / cnt
        var = s2 / cnt - mean * mean                                     # biased var, E[x^2]-E[x]^2
        scale = g * lax.rsqrt(var + eps)                                 # (1, Co)
        shift = bt - mean * scale                                        # (1, Co)
        scale_v = jnp.dot(scale, bcast, preferred_element_type=f32)      # (1, W*Co)
        shift_v = jnp.dot(shift, bcast, preferred_element_type=f32)      # (1, W*Co)
        return jnp.maximum(acc * scale_v + shift_v, 0.0)

    h1 = bn_relu(band_conv3x3(x, band1_ref, b1_ref[...]), g1_ref[...], bt1_ref[...])
    h2 = bn_relu(band_conv3x3(h1, band2_ref, b2_ref[...]), g2_ref[...], bt2_ref[...])
    res = jnp.dot(x, bandr_ref[...], preferred_element_type=f32) + brv_ref[...]
    out_ref[...] = h2 + res


# ----------------------------------------------------------------------------
# Wrapper-side weight preprocessing (parameter-sized, negligible cost)
# ----------------------------------------------------------------------------
def _make_conv_bands(w_hwio, width):
    """(3, 3, Cin, Cout) HWIO conv weight -> (3, W*Cin, W*Cout) banded matrices (one per ky).

    band_ky[(win, ci), (wout, co)] = sum_kx w[ky, kx, ci, co] * [win == wout + kx - 1]
    so the kx taps and the width-direction zero padding are folded into the matrix.
    """
    _, _, cin, cout = w_hwio.shape
    win = jnp.arange(width)[:, None]
    wout = jnp.arange(width)[None, :]
    bands = []
    for ky in range(3):
        band = jnp.zeros((width, cin, width, cout), jnp.float32)
        for kx in range(3):
            mask = (win == wout + (kx - 1)).astype(jnp.float32)          # (W, W)
            band = band + mask[:, None, :, None] * w_hwio[ky, kx][None, :, None, :]
        bands.append(band.reshape(width * cin, width * cout))
    return jnp.stack(bands, axis=0)


def _make_residual_band(wr, width):
    """(Cin, Cout) 1x1 weight -> block-diagonal (W*Cin, W*Cout) band."""
    cin, cout = wr.shape
    eye = jnp.eye(width, dtype=jnp.float32)
    return (eye[:, None, :, None] * wr[None, :, None, :]).reshape(width * cin, width * cout)


def _make_row_shift_mats(n, h):
    """(NH, NH) matrices selecting the previous / next image row, zero across image bounds."""
    nh = n * h
    i = jnp.arange(nh)[:, None]
    j = jnp.arange(nh)[None, :]
    row = i % h
    sdn = ((j == i - 1) & (row > 0)).astype(jnp.float32)        # out row i <- row i-1 (ky=0)
    sup = ((j == i + 1) & (row < h - 1)).astype(jnp.float32)    # out row i <- row i+1 (ky=2)
    return sdn, sup


# ----------------------------------------------------------------------------
# Glue: bilinear x2 upsample (PyTorch semantics, align_corners=False)
# ----------------------------------------------------------------------------
def _upsample2x_bilinear_nhwc(x):
    N, H, W, C = x.shape

    def coords(out_size, in_size):
        o = jnp.arange(out_size, dtype=jnp.float32)
        src = (o + 0.5) * (in_size / out_size) - 0.5
        src = jnp.maximum(src, 0.0)                        # PyTorch clamps negative coords
        i0 = jnp.minimum(jnp.floor(src).astype(jnp.int32), in_size - 1)
        frac = src - i0.astype(jnp.float32)
        i1 = jnp.minimum(i0 + 1, in_size - 1)
        return i0, i1, frac

    h0, h1, hf = coords(2 * H, H)
    w0, w1, wf = coords(2 * W, W)
    xh = x[:, h0] * (1.0 - hf)[None, :, None, None] + x[:, h1] * hf[None, :, None, None]
    out = xh[:, :, w0] * (1.0 - wf)[None, None, :, None] + xh[:, :, w1] * wf[None, None, :, None]
    return out


# ----------------------------------------------------------------------------
# Wrapper: DecoderBlock.forward
# ----------------------------------------------------------------------------
def decoder_block_forward(x_nchw, skip_nchw, params):
    # NCHW -> NHWC
    x = jnp.transpose(x_nchw, (0, 2, 3, 1)).astype(jnp.float32)
    skip = jnp.transpose(skip_nchw, (0, 2, 3, 1)).astype(jnp.float32)

    # TODO(synk): fuse the bilinear upsample + channel concat into the kernel to avoid
    # extra HBM round-trips of a 4/8-channel NHWC tensor; left as XLA glue here.
    x = _upsample2x_bilinear_nhwc(x)
    if x.shape[1:3] != skip.shape[1:3]:
        # TODO(synk): bilinear resize of `skip` for mismatched spatial sizes.
        raise NotImplementedError("skip spatial resize not needed for this example")
    xcat = jnp.concatenate([x, skip], axis=-1)                    # (N, H, W, Cc)

    n, h, w, cc = xcat.shape
    co = params["w1"].shape[-1]
    nh, k_in, lanes = n * h, w * cc, w * co

    # Lane-dense activation layout: rows = N*H, lanes = W*C (contiguous reshape).
    x2d = xcat.reshape(nh, k_in)

    # Precompute banded / helper matrices.
    band1 = _make_conv_bands(params["w1"], w)                     # (3, W*Cc, W*Co)
    band2 = _make_conv_bands(params["w2"], w)                     # (3, W*Co, W*Co)
    bandr = _make_residual_band(params["wr"], w)                  # (W*Cc, W*Co)
    sdn, sup = _make_row_shift_mats(n, h)                         # (NH, NH)
    fold = jnp.tile(jnp.eye(co, dtype=jnp.float32), (w, 1))       # (W*Co, Co)
    bcast = fold.T                                                # (Co, W*Co)
    b1v = jnp.tile(params["b1"].reshape(1, co), (1, w))
    b2v = jnp.tile(params["b2"].reshape(1, co), (1, w))
    brv = jnp.tile(params["br"].reshape(1, co), (1, w))

    args = (x2d, band1, band2, bandr, sdn, sup, fold, bcast,
            b1v, params["g1"].reshape(1, co), params["bt1"].reshape(1, co),
            b2v, params["g2"].reshape(1, co), params["bt2"].reshape(1, co),
            brv)

    # ~1.5 MiB total at these shapes -> keep the call monolithic (batch-stats BN spans the whole
    # tensor) and hand the compiler an explicit VMEM budget instead of the default scoped limit.
    req_bytes = sum(int(a.size) * a.dtype.itemsize for a in args) + nh * lanes * 4
    vmem_limit = int(min(2 * req_bytes + (8 << 20), 64 << 20))

    vmem = pl.BlockSpec(memory_space=pltpu.MemorySpace.VMEM)
    out2d = pl.pallas_call(
        _decoder_block_kernel,
        out_shape=jax.ShapeDtypeStruct((nh, lanes), jnp.float32),
        in_specs=[vmem] * len(args),
        out_specs=vmem,
        compiler_params=pltpu.CompilerParams(vmem_limit_bytes=vmem_limit),
    )(*args)

    # (N*H, W*Co) -> NHWC -> NCHW
    return jnp.transpose(out2d.reshape(n, h, w, co), (0, 3, 1, 2))


# ----------------------------------------------------------------------------
# Pure-JAX reference (lax.conv) for correctness checking
# ----------------------------------------------------------------------------
def decoder_block_reference(x_nchw, skip_nchw, params):
    x = jnp.transpose(x_nchw, (0, 2, 3, 1)).astype(jnp.float32)
    skip = jnp.transpose(skip_nchw, (0, 2, 3, 1)).astype(jnp.float32)
    x = _upsample2x_bilinear_nhwc(x)
    xcat = jnp.concatenate([x, skip], axis=-1)
    dn = ("NHWC", "HWIO", "NHWC")
    eps = 1e-5

    def bn_relu(y, g, bt):
        m = jnp.mean(y, axis=(0, 1, 2), keepdims=True)
        v = jnp.mean((y - m) ** 2, axis=(0, 1, 2), keepdims=True)
        return jnp.maximum((y - m) * lax.rsqrt(v + eps) * g + bt, 0.0)

    h = lax.conv_general_dilated(xcat, params["w1"], (1, 1), "SAME",
                                 dimension_numbers=dn) + params["b1"]
    h = bn_relu(h, params["g1"], params["bt1"])
    h = lax.conv_general_dilated(h, params["w2"], (1, 1), "SAME",
                                 dimension_numbers=dn) + params["b2"]
    h = bn_relu(h, params["g2"], params["bt2"])
    res = lax.conv_general_dilated(xcat, params["wr"][None, None], (1, 1), "SAME",
                                   dimension_numbers=dn) + params["br"]
    return jnp.transpose(h + res, (0, 3, 1, 2))


def init_params(key, c_cat, c_out):
    ks = jax.random.split(key, 8)
    scale = 0.1
    return {
        "w1": scale * jax.random.normal(ks[0], (3, 3, c_cat, c_out), jnp.float32),
        "b1": scale * jax.random.normal(ks[1], (c_out,), jnp.float32),
        "g1": 1.0 + 0.1 * jax.random.normal(ks[2], (c_out,), jnp.float32),
        "bt1": scale * jax.random.normal(ks[3], (c_out,), jnp.float32),
        "w2": scale * jax.random.normal(ks[4], (3, 3, c_out, c_out), jnp.float32),
        "b2": scale * jax.random.normal(ks[5], (c_out,), jnp.float32),
        "g2": 1.0 + 0.1 * jax.random.normal(ks[6], (c_out,), jnp.float32),
        "bt2": scale * jax.random.normal(ks[7], (c_out,), jnp.float32),
        "wr": scale * jax.random.normal(jax.random.fold_in(key, 99), (c_cat, c_out), jnp.float32),
        "br": scale * jax.random.normal(jax.random.fold_in(key, 100), (c_out,), jnp.float32),
    }


if __name__ == "__main__":
    # DecoderBlock(in_channels=4, out_channels=16, skip_channels=4)
    in_ch, skip_ch, out_ch = 4, 4, 16
    N, H, W = 2, 8, 8

    key = jax.random.PRNGKey(0)
    kx, ks, kp = jax.random.split(key, 3)
    x = jax.random.normal(kx, (N, in_ch, H, W), jnp.float32)            # NCHW, like torch
    skip = jax.random.normal(ks, (N, skip_ch, 2 * H, 2 * W), jnp.float32)
    params = init_params(kp, in_ch + skip_ch, out_ch)

    out = jax.jit(decoder_block_forward)(x, skip, params)
    out = jax.block_until_ready(out)

    ref = decoder_block_reference(x, skip, params)
    assert out.shape == (N, out_ch, 2 * H, 2 * W), out.shape
    assert jnp.allclose(out, ref, atol=2e-4, rtol=2e-4), float(jnp.max(jnp.abs(out - ref)))

    print("KERNEL_OK")
</pallas_src>

<mosaic_0001>
module attributes {stable_mosaic.version = 11 : i64} {
  func.func @_decoder_block_kernel(%arg0: memref<32x128xf32, #tpu.memory_space<vmem>>, %arg1: memref<3x128x256xf32, #tpu.memory_space<vmem>>, %arg2: memref<3x256x256xf32, #tpu.memory_space<vmem>>, %arg3: memref<128x256xf32, #tpu.memory_space<vmem>>, %arg4: memref<32x32xf32, #tpu.memory_space<vmem>>, %arg5: memref<32x32xf32, #tpu.memory_space<vmem>>, %arg6: memref<256x16xf32, #tpu.memory_space<vmem>>, %arg7: memref<16x256xf32, #tpu.memory_space<vmem>>, %arg8: memref<1x256xf32, #tpu.memory_space<vmem>>, %arg9: memref<1x16xf32, #tpu.memory_space<vmem>>, %arg10: memref<1x16xf32, #tpu.memory_space<vmem>>, %arg11: memref<1x256xf32, #tpu.memory_space<vmem>>, %arg12: memref<1x16xf32, #tpu.memory_space<vmem>>, %arg13: memref<1x16xf32, #tpu.memory_space<vmem>>, %arg14: memref<1x256xf32, #tpu.memory_space<vmem>>, %arg15: memref<32x256xf32, #tpu.memory_space<vmem>>) attributes {dimension_semantics = [], scalar_prefetch = 0 : i64, scratch_operands = 0 : i64, tpu.core_type = #tpu.core_type<tc>} {
    %c0 = arith.constant 0 : index
    %c0_0 = arith.constant 0 : index
    %0 = vector.load %arg0[%c0, %c0_0] : memref<32x128xf32, #tpu.memory_space<vmem>>, vector<32x128xf32>
    %c0_1 = arith.constant 0 : index
    %c0_2 = arith.constant 0 : index
    %1 = vector.load %arg4[%c0_1, %c0_2] : memref<32x32xf32, #tpu.memory_space<vmem>>, vector<32x32xf32>
    %c0_3 = arith.constant 0 : index
    %c0_4 = arith.constant 0 : index
    %2 = vector.load %arg5[%c0_3, %c0_4] : memref<32x32xf32, #tpu.memory_space<vmem>>, vector<32x32xf32>
    %c0_5 = arith.constant 0 : index
    %c0_6 = arith.constant 0 : index
    %3 = vector.load %arg6[%c0_5, %c0_6] : memref<256x16xf32, #tpu.memory_space<vmem>>, vector<256x16xf32>
    %c0_7 = arith.constant 0 : index
    %c0_8 = arith.constant 0 : index
    %4 = vector.load %arg7[%c0_7, %c0_8] : memref<16x256xf32, #tpu.memory_space<vmem>>, vector<16x256xf32>
    %c0_9 = arith.constant 0 : index
    %c0_10 = arith.constant 0 : index
    %5 = vector.load %arg8[%c0_9, %c0_10] : memref<1x256xf32, #tpu.memory_space<vmem>>, vector<1x256xf32>
    %c0_11 = arith.constant 0 : index
    %c0_12 = arith.constant 0 : index
    %c0_13 = arith.constant 0 : index
    %6 = vector.load %arg1[%c0_11, %c0_12, %c0_13] : memref<3x128x256xf32, #tpu.memory_space<vmem>>, vector<1x128x256xf32>
    %7 = vector.shape_cast %6 : vector<1x128x256xf32> to vector<128x256xf32>
    %cst = arith.constant dense<0.000000e+00> : vector<32x256xf32>
    %8 = tpu.matmul %0, %7, %cst {dimension_numbers = #tpu.dot_dimension_numbers<[1], [0], [0], [1], [0, 0, 1, 1], [], []>} : vector<32x128xf32>, vector<128x256xf32>, vector<32x256xf32> -> vector<32x256xf32>
    %c1 = arith.constant 1 : index
    %c0_14 = arith.constant 0 : index
    %c0_15 = arith.constant 0 : index
    %9 = vector.load %arg1[%c1, %c0_14, %c0_15] : memref<3x128x256xf32, #tpu.memory_space<vmem>>, vector<1x128x256xf32>
    %10 = vector.shape_cast %9 : vector<1x128x256xf32> to vector<128x256xf32>
    %cst_16 = arith.constant dense<0.000000e+00> : vector<32x256xf32>
    %11 = tpu.matmul %0, %10, %cst_16 {dimension_numbers = #tpu.dot_dimension_numbers<[1], [0], [0], [1], [0, 0, 1, 1], [], []>} : vector<32x128xf32>, vector<128x256xf32>, vector<32x256xf32> -> vector<32x256xf32>
    %c2 = arith.constant 2 : index
    %c0_17 = arith.constant 0 : index
    %c0_18 = arith.constant 0 : index
    %12 = vector.load %arg1[%c2, %c0_17, %c0_18] : memref<3x128x256xf32, #tpu.memory_space<vmem>>, vector<1x128x256xf32>
    %13 = vector.shape_cast %12 : vector<1x128x256xf32> to vector<128x256xf32>
    %cst_19 = arith.constant dense<0.000000e+00> : vector<32x256xf32>
    %14 = tpu.matmul %0, %13, %cst_19 {dimension_numbers = #tpu.dot_dimension_numbers<[1], [0], [0], [1], [0, 0, 1, 1], [], []>} : vector<32x128xf32>, vector<128x256xf32>, vector<32x256xf32> -> vector<32x256xf32>
    %cst_20 = arith.constant dense<0.000000e+00> : vector<32x256xf32>
    %15 = tpu.matmul %1, %8, %cst_20 {dimension_numbers = #tpu.dot_dimension_numbers<[1], [0], [0], [1], [0, 0, 1, 1], [], []>} : vector<32x32xf32>, vector<32x256xf32>, vector<32x256xf32> -> vector<32x256xf32>
    %16 = arith.addf %11, %15 : vector<32x256xf32>
    %cst_21 = arith.constant dense<0.000000e+00> : vector<32x256xf32>
    %17 = tpu.matmul %2, %14, %cst_21 {dimension_numbers = #tpu.dot_dimension_numbers<[1], [0], [0], [1], [0, 0, 1, 1], [], []>} : vector<32x32xf32>, vector<32x256xf32>, vector<32x256xf32> -> vector<32x256xf32>
    %18 = arith.addf %16, %17 : vector<32x256xf32>
    %19 = vector.broadcast %5 : vector<1x256xf32> to vector<32x256xf32>
    %20 = arith.addf %18, %19 : vector<32x256xf32>
    %c0_22 = arith.constant 0 : index
    %c0_23 = arith.constant 0 : index
    %21 = vector.load %arg9[%c0_22, %c0_23] : memref<1x16xf32, #tpu.memory_space<vmem>>, vector<1x16xf32>
    %c0_24 = arith.constant 0 : index
    %c0_25 = arith.constant 0 : index
    %22 = vector.load %arg10[%c0_24, %c0_25] : memref<1x16xf32, #tpu.memory_space<vmem>>, vector<1x16xf32>
    %cst_26 = arith.constant dense<0.000000e+00> : vector<256xf32>
    %23 = vector.multi_reduction <add>, %20, %cst_26 [0] : vector<32x256xf32> to vector<256xf32>
    %24 = vector.shape_cast %23 : vector<256xf32> to vector<1x256xf32>
    %cst_27 = arith.constant dense<0.000000e+00> : vector<1x16xf32>
    %25 = tpu.matmul %24, %3, %cst_27 {dimension_numbers = #tpu.dot_dimension_numbers<[1], [0], [0], [1], [0, 0, 1, 1], [], []>} : vector<1x256xf32>, vector<256x16xf32>, vector<1x16xf32> -> vector<1x16xf32>
    %26 = arith.mulf %20, %20 : vector<32x256xf32>
    %cst_28 = arith.constant dense<0.000000e+00> : vector<256xf32>
    %27 = vector.multi_reduction <add>, %26, %cst_28 [0] : vector<32x256xf32> to vector<256xf32>
    %28 = vector.shape_cast %27 : vector<256xf32> to vector<1x256xf32>
    %cst_29 = arith.constant dense<0.000000e+00> : vector<1x16xf32>
    %29 = tpu.matmul %28, %3, %cst_29 {dimension_numbers = #tpu.dot_dimension_numbers<[1], [0], [0], [1], [0, 0, 1, 1], [], []>} : vector<1x256xf32>, vector<256x16xf32>, vector<1x16xf32> -> vector<1x16xf32>
    %cst_30 = arith.constant 5.120000e+02 : f32
    %30 = vector.broadcast %cst_30 : f32 to vector<1x16xf32>
    %31 = arith.divf %25, %30 : vector<1x16xf32>
    %cst_31 = arith.constant 5.120000e+02 : f32
    %32 = vector.broadcast %cst_31 : f32 to vector<1x16xf32>
    %33 = arith.divf %29, %32 : vector<1x16xf32>
    %34 = arith.mulf %31, %31 : vector<1x16xf32>
    %35 = arith.subf %33, %34 : vector<1x16xf32>
    %cst_32 = arith.constant 9.99999974E-6 : f32
    %36 = vector.broadcast %cst_32 : f32 to vector<1x16xf32>
    %37 = arith.addf %35, %36 : vector<1x16xf32>
    %38 = math.rsqrt %37 : vector<1x16xf32>
    %39 = arith.mulf %21, %38 : vector<1x16xf32>
    %40 = arith.mulf %31, %39 : vector<1x16xf32>
    %41 = arith.subf %22, %40 : vector<1x16xf32>
    %cst_33 = arith.constant dense<0.000000e+00> : vector<1x256xf32>
    %42 = tpu.matmul %39, %4, %cst_33 {dimension_numbers = #tpu.dot_dimension_numbers<[1], [0], [0], [1], [0, 0, 1, 1], [], []>} : vector<1x16xf32>, vector<16x256xf32>, vector<1x256xf32> -> vector<1x256xf32>
    %cst_34 = arith.constant dense<0.000000e+00> : vector<1x256xf32>
    %43 = tpu.matmul %41, %4, %cst_34 {dimension_numbers = #tpu.dot_dimension_numbers<[1], [0], [0], [1], [0, 0, 1, 1], [], []>} : vector<1x16xf32>, vector<16x256xf32>, vector<1x256xf32> -> vector<1x256xf32>
    %44 = vector.broadcast %42 : vector<1x256xf32> to vector<32x256xf32>
    %45 = arith.mulf %20, %44 : vector<32x256xf32>
    %46 = vector.broadcast %43 : vector<1x256xf32> to vector<32x256xf32>
    %47 = arith.addf %45, %46 : vector<32x256xf32>
    %cst_35 = arith.constant 0.000000e+00 : f32
    %48 = vector.broadcast %cst_35 : f32 to vector<32x256xf32>
    %49 = arith.maximumf %47, %48 : vector<32x256xf32>
    %c0_36 = arith.constant 0 : index
    %c0_37 = arith.constant 0 : index
    %50 = vector.load %arg11[%c0_36, %c0_37] : memref<1x256xf32, #tpu.memory_space<vmem>>, vector<1x256xf32>
    %c0_38 = arith.constant 0 : index
    %c0_39 = arith.constant 0 : index
    %c0_40 = arith.constant 0 : index
    %51 = vector.load %arg2[%c0_38, %c0_39, %c0_40] : memref<3x256x256xf32, #tpu.memory_space<vmem>>, vector<1x256x256xf32>
    %52 = vector.shape_cast %51 : vector<1x256x256xf32> to vector<256x256xf32>
    %cst_41 = arith.constant dense<0.000000e+00> : vector<32x256xf32>
    %53 = tpu.matmul %49, %52, %cst_41 {dimension_numbers = #tpu.dot_dimension_numbers<[1], [0], [0], [1], [0, 0, 1, 1], [], []>} : vector<32x256xf32>, vector<256x256xf32>, vector<32x256xf32> -> vector<32x256xf32>
    %c1_42 = arith.constant 1 : index
    %c0_43 = arith.constant 0 : index
    %c0_44 = arith.constant 0 : index
    %54 = vector.load %arg2[%c1_42, %c0_43, %c0_44] : memref<3x256x256xf32, #tpu.memory_space<vmem>>, vector<1x256x256xf32>
    %55 = vector.shape_cast %54 : vector<1x256x256xf32> to vector<256x256xf32>
    %cst_45 = arith.constant dense<0.000000e+00> : vector<32x256xf32>
    %56 = tpu.matmul %49, %55, %cst_45 {dimension_numbers = #tpu.dot_dimension_numbers<[1], [0], [0], [1], [0, 0, 1, 1], [], []>} : vector<32x256xf32>, vector<256x256xf32>, vector<32x256xf32> -> vector<32x256xf32>
    %c2_46 = arith.constant 2 : index
    %c0_47 = arith.constant 0 : index
    %c0_48 = arith.constant 0 : index
    %57 = vector.load %arg2[%c2_46, %c0_47, %c0_48] : memref<3x256x256xf32, #tpu.memory_space<vmem>>, vector<1x256x256xf32>
    %58 = vector.shape_cast %57 : vector<1x256x256xf32> to vector<256x256xf32>
    %cst_49 = arith.constant dense<0.000000e+00> : vector<32x256xf32>
    %59 = tpu.matmul %49, %58, %cst_49 {dimension_numbers = #tpu.dot_dimension_numbers<[1], [0], [0], [1], [0, 0, 1, 1], [], []>} : vector<32x256xf32>, vector<256x256xf32>, vector<32x256xf32> -> vector<32x256xf32>
    %cst_50 = arith.constant dense<0.000000e+00> : vector<32x256xf32>
    %60 = tpu.matmul %1, %53, %cst_50 {dimension_numbers = #tpu.dot_dimension_numbers<[1], [0], [0], [1], [0, 0, 1, 1], [], []>} : vector<32x32xf32>, vector<32x256xf32>, vector<32x256xf32> -> vector<32x256xf32>
    %61 = arith.addf %56, %60 : vector<32x256xf32>
    %cst_51 = arith.constant dense<0.000000e+00> : vector<32x256xf32>
    %62 = tpu.matmul %2, %59, %cst_51 {dimension_numbers = #tpu.dot_dimension_numbers<[1], [0], [0], [1], [0, 0, 1, 1], [], []>} : vector<32x32xf32>, vector<32x256xf32>, vector<32x256xf32> -> vector<32x256xf32>
    %63 = arith.addf %61, %62 : vector<32x256xf32>
    %64 = vector.broadcast %50 : vector<1x256xf32> to vector<32x256xf32>
    %65 = arith.addf %63, %64 : vector<32x256xf32>
    %c0_52 = arith.constant 0 : index
    %c0_53 = arith.constant 0 : index
    %66 = vector.load %arg12[%c0_52, %c0_53] : memref<1x16xf32, #tpu.memory_space<vmem>>, vector<1x16xf32>
    %c0_54 = arith.constant 0 : index
    %c0_55 = arith.constant 0 : index
    %67 = vector.load %arg13[%c0_54, %c0_55] : memref<1x16xf32, #tpu.memory_space<vmem>>, vector<1x16xf32>
    %cst_56 = arith.constant dense<0.000000e+00> : vector<256xf32>
    %68 = vector.multi_reduction <add>, %65, %cst_56 [0] : vector<32x256xf32> to vector<256xf32>
    %69 = vector.shape_cast %68 : vector<256xf32> to vector<1x256xf32>
    %cst_57 = arith.constant dense<0.000000e+00> : vector<1x16xf32>
    %70 = tpu.matmul %69, %3, %cst_57 {dimension_numbers = #tpu.dot_dimension_numbers<[1], [0], [0], [1], [0, 0, 1, 1], [], []>} : vector<1x256xf32>, vector<256x16xf32>, vector<1x16xf32> -> vector<1x16xf32>
    %71 = arith.mulf %65, %65 : vector<32x256xf32>
    %cst_58 = arith.constant dense<0.000000e+00> : vector<256xf32>
    %72 = vector.multi_reduction <add>, %71, %cst_58 [0] : vector<32x256xf32> to vector<256xf32>
    %73 = vector.shape_cast %72 : vector<256xf32> to vector<1x256xf32>
    %cst_59 = arith.constant dense<0.000000e+00> : vector<1x16xf32>
    %74 = tpu.matmul %73, %3, %cst_59 {dimension_numbers = #tpu.dot_dimension_numbers<[1], [0], [0], [1], [0, 0, 1, 1], [], []>} : vector<1x256xf32>, vector<256x16xf32>, vector<1x16xf32> -> vector<1x16xf32>
    %cst_60 = arith.constant 5.120000e+02 : f32
    %75 = vector.broadcast %cst_60 : f32 to vector<1x16xf32>
    %76 = arith.divf %70, %75 : vector<1x16xf32>
    %cst_61 = arith.constant 5.120000e+02 : f32
    %77 = vector.broadcast %cst_61 : f32 to vector<1x16xf32>
    %78 = arith.divf %74, %77 : vector<1x16xf32>
    %79 = arith.mulf %76, %76 : vector<1x16xf32>
    %80 = arith.subf %78, %79 : vector<1x16xf32>
    %cst_62 = arith.constant 9.99999974E-6 : f32
    %81 = vector.broadcast %cst_62 : f32 to vector<1x16xf32>
    %82 = arith.addf %80, %81 : vector<1x16xf32>
    %83 = math.rsqrt %82 : vector<1x16xf32>
    %84 = arith.mulf %66, %83 : vector<1x16xf32>
    %85 = arith.mulf %76, %84 : vector<1x16xf32>
    %86 = arith.subf %67, %85 : vector<1x16xf32>
    %cst_63 = arith.constant dense<0.000000e+00> : vector<1x256xf32>
    %87 = tpu.matmul %84, %4, %cst_63 {dimension_numbers = #tpu.dot_dimension_numbers<[1], [0], [0], [1], [0, 0, 1, 1], [], []>} : vector<1x16xf32>, vector<16x256xf32>, vector<1x256xf32> -> vector<1x256xf32>
    %cst_64 = arith.constant dense<0.000000e+00> : vector<1x256xf32>
    %88 = tpu.matmul %86, %4, %cst_64 {dimension_numbers = #tpu.dot_dimension_numbers<[1], [0], [0], [1], [0, 0, 1, 1], [], []>} : vector<1x16xf32>, vector<16x256xf32>, vector<1x256xf32> -> vector<1x256xf32>
    %89 = vector.broadcast %87 : vector<1x256xf32> to vector<32x256xf32>
    %90 = arith.mulf %65, %89 : vector<32x256xf32>
    %91 = vector.broadcast %88 : vector<1x256xf32> to vector<32x256xf32>
    %92 = arith.addf %90, %91 : vector<32x256xf32>
    %cst_65 = arith.constant 0.000000e+00 : f32
    %93 = vector.broadcast %cst_65 : f32 to vector<32x256xf32>
    %94 = arith.maximumf %92, %93 : vector<32x256xf32>
    %c0_66 = arith.constant 0 : index
    %c0_67 = arith.constant 0 : index
    %95 = vector.load %arg3[%c0_66, %c0_67] : memref<128x256xf32, #tpu.memory_space<vmem>>, vector<128x256xf32>
    %cst_68 = arith.constant dense<0.000000e+00> : vector<32x256xf32>
    %96 = tpu.matmul %0, %95, %cst_68 {dimension_numbers = #tpu.dot_dimension_numbers<[1], [0], [0], [1], [0, 0, 1, 1], [], []>} : vector<32x128xf32>, vector<128x256xf32>, vector<32x256xf32> -> vector<32x256xf32>
    %c0_69 = arith.constant 0 : index
    %c0_70 = arith.constant 0 : index
    %97 = vector.load %arg14[%c0_69, %c0_70] : memref<1x256xf32, #tpu.memory_space<vmem>>, vector<1x256xf32>
    %98 = vector.broadcast %97 : vector<1x256xf32> to vector<32x256xf32>
    %99 = arith.addf %96, %98 : vector<32x256xf32>
    %100 = arith.addf %94, %99 : vector<32x256xf32>
    %c0_71 = arith.constant 0 : index
    %c0_72 = arith.constant 0 : index
    %101 = vector.load %arg15[%c0_71, %c0_72] : memref<32x256xf32, #tpu.memory_space<vmem>>, vector<32x256xf32>
    tpu.vector_store %arg15[%c0_71, %c0_72], %100 {strides = array<i32>} : memref<32x256xf32, #tpu.memory_space<vmem>>, vector<32x256xf32>,
    return
  }
}

</mosaic_0001>

<llo_original>
// kernel: tile.21
$region0: #{tile.21}
  %s0 = inlined_call_operand.vmem [shape: f32[16,16,16], index: 0, kind: input, shape index: {}]
  %s1 = inlined_call_operand.vmem [shape: f32[256,16], index: 1, kind: output, shape index: {}]
  %v2 = vld [vmem:[%s0] ss:$8 sm:$0xf]
  %v3 = vld [vmem:[%s0] ss:$8 sm:$0xf0]
  %vm4 = vcmask 1047556
  %v5 = vsel %vm4, %v3, %v2
  %vm6 = vcmask 130048
  %7 = vst.msk [vmem:[%s1] ss:$8 sm:$0x3] %vm6, %v5
  %s8 = scalar_lea.vmem %s1, 4294967281
  %9 = vst.msk [vmem:[%s8] ss:$8 sm:$0xc] %vm6, %v5
  %s10 = scalar_lea.vmem %s1, 4294967266
  %11 = vst.msk [vmem:[%s10] ss:$8 sm:$0x30] %vm6, %v5
  %s12 = scalar_lea.vmem %s1, 4294967251
  %13 = vst.msk [vmem:[%s12] ss:$8 sm:$0xc0] %vm6, %v5
  %s14 = scalar_lea.vmem %s0, 64
  %v15 = vld [vmem:[%s14] ss:$8 sm:$0xf]
  %s16 = scalar_lea.vmem %s0, 64
  %v17 = vld [vmem:[%s16] ss:$8 sm:$0xf0]
  %vm18 = vcmask 1047556
  %v19 = vsel %vm18, %v17, %v15
  %vm20 = vcmask 130048
  %s21 = scalar_lea.vmem %s1, 4
  %22 = vst.msk [vmem:[%s21] ss:$8 sm:$0x3] %vm20, %v19
  %s23 = scalar_lea.vmem %s1, 4294967285
  %24 = vst.msk [vmem:[%s23] ss:$8 sm:$0xc] %vm20, %v19
  %s25 = scalar_lea.vmem %s1, 4294967270
  %26 = vst.msk [vmem:[%s25] ss:$8 sm:$0x30] %vm20, %v19
  %s27 = scalar_lea.vmem %s1, 4294967255
  %28 = vst.msk [vmem:[%s27] ss:$8 sm:$0xc0] %vm20, %v19
  %s29 = scalar_lea.vmem %s0, 128
  %v30 = vld [vmem:[%s29] ss:$8 sm:$0xf]
  %s31 = scalar_lea.vmem %s0, 128
  %v32 = vld [vmem:[%s31] ss:$8 sm:$0xf0]
  %vm33 = vcmask 1047556
  %v34 = vsel %vm33, %v32, %v30
  %vm35 = vcmask 130048
  %s36 = scalar_lea.vmem %s1, 16
  %37 = vst.msk [vmem:[%s36] ss:$8 sm:$0x3] %vm35, %v34
  %s38 = scalar_lea.vmem %s1, 1
  %39 = vst.msk [vmem:[%s38] ss:$8 sm:$0xc] %vm35, %v34
  %s40 = scalar_lea.vmem %s1, 4294967282
  %41 = vst.msk [vmem:[%s40] ss:$8 sm:$0x30] %vm35, %v34
  %s42 = scalar_lea.vmem %s1, 4294967267
  %43 = vst.msk [vmem:[%s42] ss:$8 sm:$0xc0] %vm35, %v34
  %s44 = scalar_lea.vmem %s0, 192
  %v45 = vld [vmem:[%s44] ss:$8 sm:$0xf]
  %s46 = scalar_lea.vmem %s0, 192
  %v47 = vld [vmem:[%s46] ss:$8 sm:$0xf0]
  %vm48 = vcmask 1047556
  %v49 = vsel %vm48, %v47, %v45
  %vm50 = vcmask 130048
  %s51 = scalar_lea.vmem %s1, 20
  %52 = vst.msk [vmem:[%s51] ss:$8 sm:$0x3] %vm50, %v49
  %s53 = scalar_lea.vmem %s1, 5
  %54 = vst.msk [vmem:[%s53] ss:$8 sm:$0xc] %vm50, %v49
  %s55 = scalar_lea.vmem %s1, 4294967286
  %56 = vst.msk [vmem:[%s55] ss:$8 sm:$0x30] %vm50, %v49
  %s57 = scalar_lea.vmem %s1, 4294967271
  %58 = vst.msk [vmem:[%s57] ss:$8 sm:$0xc0] %vm50, %v49
  %s59 = scalar_lea.vmem %s0, 7
  %s60 = smov 3
  %v61 = vld [vmem:[%s59] ss:$16 sm:%s60]
  %s62 = scalar_lea.vmem %s0, 7
  %s63 = smov 12
  %v64 = vld [vmem:[%s62] ss:$16 sm:%s63]
  %vm65 = vcmask 1043458
  %v66 = vsel %vm65, %v64, %v61
  %s67 = scalar_lea.vmem %s0, 7
  %s68 = smov 48
  %v69 = vld [vmem:[%s67] ss:$16 sm:%s68]
  %vm70 = vcmask 1045508
  %v71 = vsel %vm70, %v69, %v66
  %s72 = scalar_lea.vmem %s0, 7
  %s73 = smov 192
  %v74 = vld [vmem:[%s72] ss:$16 sm:%s73]
  %vm75 = vcmask 1047558
  %v76 = vsel %vm75, %v74, %v71
  %77 = vrot.lane.b32.xlu0 %v76, 112
  %v78 = vpop.permute.xlu0 %77
  %vm79 = vcmask 1048448
  %80 = vst.msk [vmem:[%s1] sm:$0xff] %vm79, %v78
  %s81 = scalar_lea.vmem %s0, 15
  %s82 = smov 3
  %v83 = vld [vmem:[%s81] ss:$16 sm:%s82]
  %s84 = scalar_lea.vmem %s0, 15
  %s85 = smov 12
  %v86 = vld [vmem:[%s84] ss:$16 sm:%s85]
  %vm87 = vcmask 1043458
  %v88 = vsel %vm87, %v86, %v83
  %s89 = scalar_lea.vmem %s0, 15
  %s90 = smov 48
  %v91 = vld [vmem:[%s89] ss:$16 sm:%s90]
  %vm92 = vcmask 1045508
  %v93 = vsel %vm92, %v91, %v88
  %s94 = scalar_lea.vmem %s0, 15
  %s95 = smov 192
  %v96 = vld [vmem:[%s94] ss:$16 sm:%s95]
  %vm97 = vcmask 1047558
  %v98 = vsel %vm97, %v96, %v93
  %99 = vrot.lane.b32.xlu0 %v98, 112
  %v100 = vpop.permute.xlu0 %99
  %vm101 = vcmask 1048448
  %s102 = scalar_lea.vmem %s1, 8
  %103 = vst.msk [vmem:[%s102] sm:$0xff] %vm101, %v100
  %s104 = scalar_lea.vmem %s0, 135
  %s105 = smov 3
  %v106 = vld [vmem:[%s104] ss:$16 sm:%s105]
  %s107 = scalar_lea.vmem %s0, 135
  %s108 = smov 12
  %v109 = vld [vmem:[%s107] ss:$16 sm:%s108]
  %vm110 = vcmask 1043458
  %v111 = vsel %vm110, %v109, %v106
  %s112 = scalar_lea.vmem %s0, 135
  %s113 = smov 48
  %v114 = vld [vmem:[%s112] ss:$16 sm:%s113]
  %vm115 = vcmask 1045508
  %v116 = vsel %vm115, %v114, %v111
  %s117 = scalar_lea.vmem %s0, 135
  %s118 = smov 192
  %v119 = vld [vmem:[%s117] ss:$16 sm:%s118]
  %vm120 = vcmask 1047558
  %v121 = vsel %vm120, %v119, %v116
  %122 = vrot.lane.b32.xlu0 %v121, 112
  %v123 = vpop.permute.xlu0 %122
  %vm124 = vcmask 1048448
  %s125 = scalar_lea.vmem %s1, 16
  %126 = vst.msk [vmem:[%s125] sm:$0xff] %vm124, %v123
  %s127 = scalar_lea.vmem %s0, 143
  %s128 = smov 3
  %v129 = vld [vmem:[%s127] ss:$16 sm:%s128]
  %s130 = scalar_lea.vmem %s0, 143
  %s131 = smov 12
  %v132 = vld [vmem:[%s130] ss:$16 sm:%s131]
  %vm133 = vcmask 1043458
  %v134 = vsel %vm133, %v132, %v129
  %s135 = scalar_lea.vmem %s0, 143
  %s136 = smov 48
  %v137 = vld [vmem:[%s135] ss:$16 sm:%s136]
  %vm138 = vcmask 1045508
  %v139 = vsel %vm138, %v137, %v134
  %s140 = scalar_lea.vmem %s0, 143
  %s141 = smov 192
  %v142 = vld [vmem:[%s140] ss:$16 sm:%s141]
  %vm143 = vcmask 1047558
  %v144 = vsel %vm143, %v142, %v139
  %145 = vrot.lane.b32.xlu0 %v144, 112
  %v146 = vpop.permute.xlu0 %145
  %vm147 = vcmask 1048448
  %s148 = scalar_lea.vmem %s1, 24
  %149 = vst.msk [vmem:[%s148] sm:$0xff] %vm147, %v146
  %s150 = scalar_lea.vmem %s0, 6
  %s151 = smov 3
  %v152 = vld [vmem:[%s150] ss:$16 sm:%s151]
  %s153 = scalar_lea.vmem %s0, 6
  %s154 = smov 12
  %v155 = vld [vmem:[%s153] ss:$16 sm:%s154]
  %vm156 = vcmask 1043458
  %v157 = vsel %vm156, %v155, %v152
  %s158 = scalar_lea.vmem %s0, 6
  %s159 = smov 48
  %v160 = vld [vmem:[%s158] ss:$16 sm:%s159]
  %vm161 = vcmask 1045508
  %v162 = vsel %vm161, %v160, %v157
  %s163 = scalar_lea.vmem %s0, 6
  %s164 = smov 192
  %v165 = vld [vmem:[%s163] ss:$16 sm:%s164]
  %vm166 = vcmask 1047558
  %v167 = vsel %vm166, %v165, %v162
  %168 = vrot.lane.b32.xlu0 %v167, 96
  %v169 = vpop.permute.xlu0 %168
  %vm170 = vcmask 917248
  %171 = vst.msk [vmem:[%s1] sm:$0xff] %vm170, %v169
  %s172 = scalar_lea.vmem %s0, 14
  %s173 = smov 3
  %v174 = vld [vmem:[%s172] ss:$16 sm:%s173]
  %s175 = scalar_lea.vmem %s0, 14
  %s176 = smov 12
  %v177 = vld [vmem:[%s175] ss:$16 sm:%s176]
  %vm178 = vcmask 1043458
  %v179 = vsel %vm178, %v177, %v174
  %s180 = scalar_lea.vmem %s0, 14
  %s181 = smov 48
  %v182 = vld [vmem:[%s180] ss:$16 sm:%s181]
  %vm183 = vcmask 1045508
  %v184 = vsel %vm183, %v182, %v179
  %s185 = scalar_lea.vmem %s0, 14
  %s186 = smov 192
  %v187 = vld [vmem:[%s185] ss:$16 sm:%s186]
  %vm188 = vcmask 1047558
  %v189 = vsel %vm188, %v187, %v184
  %190 = vrot.lane.b32.xlu0 %v189, 96
  %v191 = vpop.permute.xlu0 %190
  %vm192 = vcmask 917248
  %s193 = scalar_lea.vmem %s1, 8
  %194 = vst.msk [vmem:[%s193] sm:$0xff] %vm192, %v191
  %s195 = scalar_lea.vmem %s0, 134
  %s196 = smov 3
  %v197 = vld [vmem:[%s195] ss:$16 sm:%s196]
  %s198 = scalar_lea.vmem %s0, 134
  %s199 = smov 12
  %v200 = vld [vmem:[%s198] ss:$16 sm:%s199]
  %vm201 = vcmask 1043458
  %v202 = vsel %vm201, %v200, %v197
  %s203 = scalar_lea.vmem %s0, 134
  %s204 = smov 48
  %v205 = vld [vmem:[%s203] ss:$16 sm:%s204]
  %vm206 = vcmask 1045508
  %v207 = vsel %vm206, %v205, %v202
  %s208 = scalar_lea.vmem %s0, 134
  %s209 = smov 192
  %v210 = vld [vmem:[%s208] ss:$16 sm:%s209]
  %vm211 = vcmask 1047558
  %v212 = vsel %vm211, %v210, %v207
  %213 = vrot.lane.b32.xlu0 %v212, 96
  %v214 = vpop.permute.xlu0 %213
  %vm215 = vcmask 917248
  %s216 = scalar_lea.vmem %s1, 16
  %217 = vst.msk [vmem:[%s216] sm:$0xff] %vm215, %v214
  %s218 = scalar_lea.vmem %s0, 142
  %s219 = smov 3
  %v220 = vld [vmem:[%s218] ss:$16 sm:%s219]
  %s221 = scalar_lea.vmem %s0, 142
  %s222 = smov 12
  %v223 = vld [vmem:[%s221] ss:$16 sm:%s222]
  %vm224 = vcmask 1043458
  %v225 = vsel %vm224, %v223, %v220
  %s226 = scalar_lea.vmem %s0, 142
  %s227 = smov 48
  %v228 = vld [vmem:[%s226] ss:$16 sm:%s227]
  %vm229 = vcmask 1045508
  %v230 = vsel %vm229, %v228, %v225
  %s231 = scalar_lea.vmem %s0, 142
  %s232 = smov 192
  %v233 = vld [vmem:[%s231] ss:$16 sm:%s232]
  %vm234 = vcmask 1047558
  %v235 = vsel %vm234, %v233, %v230
  %236 = vrot.lane.b32.xlu0 %v235, 96
  %v237 = vpop.permute.xlu0 %236
  %vm238 = vcmask 917248
  %s239 = scalar_lea.vmem %s1, 24
  %240 = vst.msk [vmem:[%s239] sm:$0xff] %vm238, %v237
  %s241 = scalar_lea.vmem %s0, 5
  %s242 = smov 3
  %v243 = vld [vmem:[%s241] ss:$16 sm:%s242]
  %s244 = scalar_lea.vmem %s0, 5
  %s245 = smov 12
  %v246 = vld [vmem:[%s244] ss:$16 sm:%s245]
  %vm247 = vcmask 1043458
  %v248 = vsel %vm247, %v246, %v243
  %s249 = scalar_lea.vmem %s0, 5
  %s250 = smov 48
  %v251 = vld [vmem:[%s249] ss:$16 sm:%s250]
  %vm252 = vcmask 1045508
  %v253 = vsel %vm252, %v251, %v248
  %s254 = scalar_lea.vmem %s0, 5
  %s255 = smov 192
  %v256 = vld [vmem:[%s254] ss:$16 sm:%s255]
  %vm257 = vcmask 1047558
  %v258 = vsel %vm257, %v256, %v253
  %259 = vrot.lane.b32.xlu0 %v258, 80
  %v260 = vpop.permute.xlu0 %259
  %vm261 = vcmask 786048
  %262 = vst.msk [vmem:[%s1] sm:$0xff] %vm261, %v260
  %s263 = scalar_lea.vmem %s0, 13
  %s264 = smov 3
  %v265 = vld [vmem:[%s263] ss:$16 sm:%s264]
  %s266 = scalar_lea.vmem %s0, 13
  %s267 = smov 12
  %v268 = vld [vmem:[%s266] ss:$16 sm:%s267]
  %vm269 = vcmask 1043458
  %v270 = vsel %vm269, %v268, %v265
  %s271 = scalar_lea.vmem %s0, 13
  %s272 = smov 48
  %v273 = vld [vmem:[%s271] ss:$16 sm:%s272]
  %vm274 = vcmask 1045508
  %v275 = vsel %vm274, %v273, %v270
  %s276 = scalar_lea.vmem %s0, 13
  %s277 = smov 192
  %v278 = vld [vmem:[%s276] ss:$16 sm:%s277]
  %vm279 = vcmask 1047558
  %v280 = vsel %vm279, %v278, %v275
  %281 = vrot.lane.b32.xlu0 %v280, 80
  %v282 = vpop.permute.xlu0 %281
  %vm283 = vcmask 786048
  %s284 = scalar_lea.vmem %s1, 8
  %285 = vst.msk [vmem:[%s284] sm:$0xff] %vm283, %v282
  %s286 = scalar_lea.vmem %s0, 133
  %s287 = smov 3
  %v288 = vld [vmem:[%s286] ss:$16 sm:%s287]
  %s289 = scalar_lea.vmem %s0, 133
  %s290 = smov 12
  %v291 = vld [vmem:[%s289] ss:$16 sm:%s290]
  %vm292 = vcmask 1043458
  %v293 = vsel %vm292, %v291, %v288
  %s294 = scalar_lea.vmem %s0, 133
  %s295 = smov 48
  %v296 = vld [vmem:[%s294] ss:$16 sm:%s295]
  %vm297 = vcmask 1045508
  %v298 = vsel %vm297, %v296, %v293
  %s299 = scalar_lea.vmem %s0, 133
  %s300 = smov 192
  %v301 = vld [vmem:[%s299] ss:$16 sm:%s300]
  %vm302 = vcmask 1047558
  %v303 = vsel %vm302, %v301, %v298
  %304 = vrot.lane.b32.xlu0 %v303, 80
  %v305 = vpop.permute.xlu0 %304
  %vm306 = vcmask 786048
  %s307 = scalar_lea.vmem %s1, 16
  %308 = vst.msk [vmem:[%s307] sm:$0xff] %vm306, %v305
  %s309 = scalar_lea.vmem %s0, 141
  %s310 = smov 3
  %v311 = vld [vmem:[%s309] ss:$16 sm:%s310]
  %s312 = scalar_lea.vmem %s0, 141
  %s313 = smov 12
  %v314 = vld [vmem:[%s312] ss:$16 sm:%s313]
  %vm315 = vcmask 1043458
  %v316 = vsel %vm315, %v314, %v311
  %s317 = scalar_lea.vmem %s0, 141
  %s318 = smov 48
  %v319 = vld [vmem:[%s317] ss:$16 sm:%s318]
  %vm320 = vcmask 1045508
  %v321 = vsel %vm320, %v319, %v316
  %s322 = scalar_lea.vmem %s0, 141
  %s323 = smov 192
  %v324 = vld [vmem:[%s322] ss:$16 sm:%s323]
  %vm325 = vcmask 1047558
  %v326 = vsel %vm325, %v324, %v321
  %327 = vrot.lane.b32.xlu0 %v326, 80
  %v328 = vpop.permute.xlu0 %327
  %vm329 = vcmask 786048
  %s330 = scalar_lea.vmem %s1, 24
  %331 = vst.msk [vmem:[%s330] sm:$0xff] %vm329, %v328
  %s332 = scalar_lea.vmem %s0, 4
  %s333 = smov 3
  %v334 = vld [vmem:[%s332] ss:$16 sm:%s333]
  %s335 = scalar_lea.vmem %s0, 4
  %s336 = smov 12
  %v337 = vld [vmem:[%s335] ss:$16 sm:%s336]
  %vm338 = vcmask 1043458
  %v339 = vsel %vm338, %v337, %v334
  %s340 = scalar_lea.vmem %s0, 4
  %s341 = smov 48
  %v342 = vld [vmem:[%s340] ss:$16 sm:%s341]
  %vm343 = vcmask 1045508
  %v344 = vsel %vm343, %v342, %v339
  %s345 = scalar_lea.vmem %s0, 4
  %s346 = smov 192
  %v347 = vld [vmem:[%s345] ss:$16 sm:%s346]
  %vm348 = vcmask 1047558
  %v349 = vsel %vm348, %v347, %v344
  %350 = vrot.lane.b32.xlu0 %v349, 64
  %v351 = vpop.permute.xlu0 %350
  %vm352 = vcmask 654848
  %353 = vst.msk [vmem:[%s1] sm:$0xff] %vm352, %v351
  %s354 = scalar_lea.vmem %s0, 12
  %s355 = smov 3
  %v356 = vld [vmem:[%s354] ss:$16 sm:%s355]
  %s357 = scalar_lea.vmem %s0, 12
  %s358 = smov 12
  %v359 = vld [vmem:[%s357] ss:$16 sm:%s358]
  %vm360 = vcmask 1043458
  %v361 = vsel %vm360, %v359, %v356
  %s362 = scalar_lea.vmem %s0, 12
  %s363 = smov 48
  %v364 = vld [vmem:[%s362] ss:$16 sm:%s363]
  %vm365 = vcmask 1045508
  %v366 = vsel %vm365, %v364, %v361
  %s367 = scalar_lea.vmem %s0, 12
  %s368 = smov 192
  %v369 = vld [vmem:[%s367] ss:$16 sm:%s368]
  %vm370 = vcmask 1047558
  %v371 = vsel %vm370, %v369, %v366
  %372 = vrot.lane.b32.xlu0 %v371, 64
  %v373 = vpop.permute.xlu0 %372
  %vm374 = vcmask 654848
  %s375 = scalar_lea.vmem %s1, 8
  %376 = vst.msk [vmem:[%s375] sm:$0xff] %vm374, %v373
  %s377 = scalar_lea.vmem %s0, 132
  %s378 = smov 3
  %v379 = vld [vmem:[%s377] ss:$16 sm:%s378]
  %s380 = scalar_lea.vmem %s0, 132
  %s381 = smov 12
  %v382 = vld [vmem:[%s380] ss:$16 sm:%s381]
  %vm383 = vcmask 1043458
  %v384 = vsel %vm383, %v382, %v379
  %s385 = scalar_lea.vmem %s0, 132
  %s386 = smov 48
  %v387 = vld [vmem:[%s385] ss:$16 sm:%s386]
  %vm388 = vcmask 1045508
  %v389 = vsel %vm388, %v387, %v384
  %s390 = scalar_lea.vmem %s0, 132
  %s391 = smov 192
  %v392 = vld [vmem:[%s390] ss:$16 sm:%s391]
  %vm393 = vcmask 1047558
  %v394 = vsel %vm393, %v392, %v389
  %395 = vrot.lane.b32.xlu0 %v394, 64
  %v396 = vpop.permute.xlu0 %395
  %vm397 = vcmask 654848
  %s398 = scalar_lea.vmem %s1, 16
  %399 = vst.msk [vmem:[%s398] sm:$0xff] %vm397, %v396
  %s400 = scalar_lea.vmem %s0, 140
  %s401 = smov 3
  %v402 = vld [vmem:[%s400] ss:$16 sm:%s401]
  %s403 = scalar_lea.vmem %s0, 140
  %s404 = smov 12
  %v405 = vld [vmem:[%s403] ss:$16 sm:%s404]
  %vm406 = vcmask 1043458
  %v407 = vsel %vm406, %v405, %v402
  %s408 = scalar_lea.vmem %s0, 140
  %s409 = smov 48
  %v410 = vld [vmem:[%s408] ss:$16 sm:%s409]
  %vm411 = vcmask 1045508
  %v412 = vsel %vm411, %v410, %v407
  %s413 = scalar_lea.vmem %s0, 140
  %s414 = smov 192
  %v415 = vld [vmem:[%s413] ss:$16 sm:%s414]
  %vm416 = vcmask 1047558
  %v417 = vsel %vm416, %v415, %v412
  %418 = vrot.lane.b32.xlu0 %v417, 64
  %v419 = vpop.permute.xlu0 %418
  %vm420 = vcmask 654848
  %s421 = scalar_lea.vmem %s1, 24
  %422 = vst.msk [vmem:[%s421] sm:$0xff] %vm420, %v419
  %s423 = scalar_lea.vmem %s0, 3
  %s424 = smov 3
  %v425 = vld [vmem:[%s423] ss:$16 sm:%s424]
  %s426 = scalar_lea.vmem %s0, 3
  %s427 = smov 12
  %v428 = vld [vmem:[%s426] ss:$16 sm:%s427]
  %vm429 = vcmask 1043458
  %v430 = vsel %vm429, %v428, %v425
  %s431 = scalar_lea.vmem %s0, 3
  %s432 = smov 48
  %v433 = vld [vmem:[%s431] ss:$16 sm:%s432]
  %vm434 = vcmask 1045508
  %v435 = vsel %vm434, %v433, %v430
  %s436 = scalar_lea.vmem %s0, 3
  %s437 = smov 192
  %v438 = vld [vmem:[%s436] ss:$16 sm:%s437]
  %vm439 = vcmask 1047558
  %v440 = vsel %vm439, %v438, %v435
  %441 = vrot.lane.b32.xlu0 %v440, 48
  %v442 = vpop.permute.xlu0 %441
  %vm443 = vcmask 523648
  %444 = vst.msk [vmem:[%s1] sm:$0xff] %vm443, %v442
  %s445 = scalar_lea.vmem %s0, 11
  %s446 = smov 3
  %v447 = vld [vmem:[%s445] ss:$16 sm:%s446]
  %s448 = scalar_lea.vmem %s0, 11
  %s449 = smov 12
  %v450 = vld [vmem:[%s448] ss:$16 sm:%s449]
  %vm451 = vcmask 1043458
  %v452 = vsel %vm451, %v450, %v447
  %s453 = scalar_lea.vmem %s0, 11
  %s454 = smov 48
  %v455 = vld [vmem:[%s453] ss:$16 sm:%s454]
  %vm456 = vcmask 1045508
  %v457 = vsel %vm456, %v455, %v452
  %s458 = scalar_lea.vmem %s0, 11
  %s459 = smov 192
  %v460 = vld [vmem:[%s458] ss:$16 sm:%s459]
  %vm461 = vcmask 1047558
  %v462 = vsel %vm461, %v460, %v457
  %463 = vrot.lane.b32.xlu0 %v462, 48
  %v464 = vpop.permute.xlu0 %463
  %vm465 = vcmask 523648
  %s466 = scalar_lea.vmem %s1, 8
  %467 = vst.msk [vmem:[%s466] sm:$0xff] %vm465, %v464
  %s468 = scalar_lea.vmem %s0, 131
  %s469 = smov 3
  %v470 = vld [vmem:[%s468] ss:$16 sm:%s469]
  %s471 = scalar_lea.vmem %s0, 131
  %s472 = smov 12
  %v473 = vld [vmem:[%s471] ss:$16 sm:%s472]
  %vm474 = vcmask 1043458
  %v475 = vsel %vm474, %v473, %v470
  %s476 = scalar_lea.vmem %s0, 131
  %s477 = smov 48
  %v478 = vld [vmem:[%s476] ss:$16 sm:%s477]
  %vm479 = vcmask 1045508
  %v480 = vsel %vm479, %v478, %v475
  %s481 = scalar_lea.vmem %s0, 131
  %s482 = smov 192
  %v483 = vld [vmem:[%s481] ss:$16 sm:%s482]
  %vm484 = vcmask 1047558
  %v485 = vsel %vm484, %v483, %v480
  %486 = vrot.lane.b32.xlu0 %v485, 48
  %v487 = vpop.permute.xlu0 %486
  %vm488 = vcmask 523648
  %s489 = scalar_lea.vmem %s1, 16
  %490 = vst.msk [vmem:[%s489] sm:$0xff] %vm488, %v487
  %s491 = scalar_lea.vmem %s0, 139
  %s492 = smov 3
  %v493 = vld [vmem:[%s491] ss:$16 sm:%s492]
  %s494 = scalar_lea.vmem %s0, 139
  %s495 = smov 12
  %v496 = vld [vmem:[%s494] ss:$16 sm:%s495]
  %vm497 = vcmask 1043458
  %v498 = vsel %vm497, %v496, %v493
  %s499 = scalar_lea.vmem %s0, 139
  %s500 = smov 48
  %v501 = vld [vmem:[%s499] ss:$16 sm:%s500]
  %vm502 = vcmask 1045508
  %v503 = vsel %vm502, %v501, %v498
  %s504 = scalar_lea.vmem %s0, 139
  %s505 = smov 192
  %v506 = vld [vmem:[%s504] ss:$16 sm:%s505]
  %vm507 = vcmask 1047558
  %v508 = vsel %vm507, %v506, %v503
  %509 = vrot.lane.b32.xlu0 %v508, 48
  %v510 = vpop.permute.xlu0 %509
  %vm511 = vcmask 523648
  %s512 = scalar_lea.vmem %s1, 24
  %513 = vst.msk [vmem:[%s512] sm:$0xff] %vm511, %v510
  %s514 = scalar_lea.vmem %s0, 2
  %s515 = smov 3
  %v516 = vld [vmem:[%s514] ss:$16 sm:%s515]
  %s517 = scalar_lea.vmem %s0, 2
  %s518 = smov 12
  %v519 = vld [vmem:[%s517] ss:$16 sm:%s518]
  %vm520 = vcmask 1043458
  %v521 = vsel %vm520, %v519, %v516
  %s522 = scalar_lea.vmem %s0, 2
  %s523 = smov 48
  %v524 = vld [vmem:[%s522] ss:$16 sm:%s523]
  %vm525 = vcmask 1045508
  %v526 = vsel %vm525, %v524, %v521
  %s527 = scalar_lea.vmem %s0, 2
  %s528 = smov 192
  %v529 = vld [vmem:[%s527] ss:$16 sm:%s528]
  %vm530 = vcmask 1047558
  %v531 = vsel %vm530, %v529, %v526
  %532 = vrot.lane.b32.xlu0 %v531, 32
  %v533 = vpop.permute.xlu0 %532
  %vm534 = vcmask 392448
  %535 = vst.msk [vmem:[%s1] sm:$0xff] %vm534, %v533
  %s536 = scalar_lea.vmem %s0, 10
  %s537 = smov 3
  %v538 = vld [vmem:[%s536] ss:$16 sm:%s537]
  %s539 = scalar_lea.vmem %s0, 10
  %s540 = smov 12
  %v541 = vld [vmem:[%s539] ss:$16 sm:%s540]
  %vm542 = vcmask 1043458
  %v543 = vsel %vm542, %v541, %v538
  %s544 = scalar_lea.vmem %s0, 10
  %s545 = smov 48
  %v546 = vld [vmem:[%s544] ss:$16 sm:%s545]
  %vm547 = vcmask 1045508
  %v548 = vsel %vm547, %v546, %v543
  %s549 = scalar_lea.vmem %s0, 10
  %s550 = smov 192
  %v551 = vld [vmem:[%s549] ss:$16 sm:%s550]
  %vm552 = vcmask 1047558
  %v553 = vsel %vm552, %v551, %v548
  %554 = vrot.lane.b32.xlu0 %v553, 32
  %v555 = vpop.permute.xlu0 %554
  %vm556 = vcmask 392448
  %s557 = scalar_lea.vmem %s1, 8
  %558 = vst.msk [vmem:[%s557] sm:$0xff] %vm556, %v555
  %s559 = scalar_lea.vmem %s0, 130
  %s560 = smov 3
  %v561 = vld [vmem:[%s559] ss:$16 sm:%s560]
  %s562 = scalar_lea.vmem %s0, 130
  %s563 = smov 12
  %v564 = vld [vmem:[%s562] ss:$16 sm:%s563]
  %vm565 = vcmask 1043458
  %v566 = vsel %vm565, %v564, %v561
  %s567 = scalar_lea.vmem %s0, 130
  %s568 = smov 48
  %v569 = vld [vmem:[%s567] ss:$16 sm:%s568]
  %vm570 = vcmask 1045508
  %v571 = vsel %vm570, %v569, %v566
  %s572 = scalar_lea.vmem %s0, 130
  %s573 = smov 192
  %v574 = vld [vmem:[%s572] ss:$16 sm:%s573]
  %vm575 = vcmask 1047558
  %v576 = vsel %vm575, %v574, %v571
  %577 = vrot.lane.b32.xlu0 %v576, 32
  %v578 = vpop.permute.xlu0 %577
  %vm579 = vcmask 392448
  %s580 = scalar_lea.vmem %s1, 16
  %581 = vst.msk [vmem:[%s580] sm:$0xff] %vm579, %v578
  %s582 = scalar_lea.vmem %s0, 138
  %s583 = smov 3
  %v584 = vld [vmem:[%s582] ss:$16 sm:%s583]
  %s585 = scalar_lea.vmem %s0, 138
  %s586 = smov 12
  %v587 = vld [vmem:[%s585] ss:$16 sm:%s586]
  %vm588 = vcmask 1043458
  %v589 = vsel %vm588, %v587, %v584
  %s590 = scalar_lea.vmem %s0, 138
  %s591 = smov 48
  %v592 = vld [vmem:[%s590] ss:$16 sm:%s591]
  %vm593 = vcmask 1045508
  %v594 = vsel %vm593, %v592, %v589
  %s595 = scalar_lea.vmem %s0, 138
  %s596 = smov 192
  %v597 = vld [vmem:[%s595] ss:$16 sm:%s596]
  %vm598 = vcmask 1047558
  %v599 = vsel %vm598, %v597, %v594
  %600 = vrot.lane.b32.xlu0 %v599, 32
  %v601 = vpop.permute.xlu0 %600
  %vm602 = vcmask 392448
  %s603 = scalar_lea.vmem %s1, 24
  %604 = vst.msk [vmem:[%s603] sm:$0xff] %vm602, %v601
  %s605 = scalar_lea.vmem %s0, 1
  %s606 = smov 3
  %v607 = vld [vmem:[%s605] ss:$16 sm:%s606]
  %s608 = scalar_lea.vmem %s0, 1
  %s609 = smov 12
  %v610 = vld [vmem:[%s608] ss:$16 sm:%s609]
  %vm611 = vcmask 1043458
  %v612 = vsel %vm611, %v610, %v607
  %s613 = scalar_lea.vmem %s0, 1
  %s614 = smov 48
  %v615 = vld [vmem:[%s613] ss:$16 sm:%s614]
  %vm616 = vcmask 1045508
  %v617 = vsel %vm616, %v615, %v612
  %s618 = scalar_lea.vmem %s0, 1
  %s619 = smov 192
  %v620 = vld [vmem:[%s618] ss:$16 sm:%s619]
  %vm621 = vcmask 1047558
  %v622 = vsel %vm621, %v620, %v617
  %623 = vrot.lane.b32.xlu0 %v622, 16
  %v624 = vpop.permute.xlu0 %623
  %vm625 = vcmask 261248
  %626 = vst.msk [vmem:[%s1] sm:$0xff] %vm625, %v624
  %s627 = scalar_lea.vmem %s0, 9
  %s628 = smov 3
  %v629 = vld [vmem:[%s627] ss:$16 sm:%s628]
  %s630 = scalar_lea.vmem %s0, 9
  %s631 = smov 12
  %v632 = vld [vmem:[%s630] ss:$16 sm:%s631]
  %vm633 = vcmask 1043458
  %v634 = vsel %vm633, %v632, %v629
  %s635 = scalar_lea.vmem %s0, 9
  %s636 = smov 48
  %v637 = vld [vmem:[%s635] ss:$16 sm:%s636]
  %vm638 = vcmask 1045508
  %v639 = vsel %vm638, %v637, %v634
  %s640 = scalar_lea.vmem %s0, 9
  %s641 = smov 192
  %v642 = vld [vmem:[%s640] ss:$16 sm:%s641]
  %vm643 = vcmask 1047558
  %v644 = vsel %vm643, %v642, %v639
  %645 = vrot.lane.b32.xlu0 %v644, 16
  %v646 = vpop.permute.xlu0 %645
  %vm647 = vcmask 261248
  %s648 = scalar_lea.vmem %s1, 8
  %649 = vst.msk [vmem:[%s648] sm:$0xff] %vm647, %v646
  %s650 = scalar_lea.vmem %s0, 129
  %s651 = smov 3
  %v652 = vld [vmem:[%s650] ss:$16 sm:%s651]
  %s653 = scalar_lea.vmem %s0, 129
  %s654 = smov 12
  %v655 = vld [vmem:[%s653] ss:$16 sm:%s654]
  %vm656 = vcmask 1043458
  %v657 = vsel %vm656, %v655, %v652
  %s658 = scalar_lea.vmem %s0, 129
  %s659 = smov 48
  %v660 = vld [vmem:[%s658] ss:$16 sm:%s659]
  %vm661 = vcmask 1045508
  %v662 = vsel %vm661, %v660, %v657
  %s663 = scalar_lea.vmem %s0, 129
  %s664 = smov 192
  %v665 = vld [vmem:[%s663] ss:$16 sm:%s664]
  %vm666 = vcmask 1047558
  %v667 = vsel %vm666, %v665, %v662
  %668 = vrot.lane.b32.xlu0 %v667, 16
  %v669 = vpop.permute.xlu0 %668
  %vm670 = vcmask 261248
  %s671 = scalar_lea.vmem %s1, 16
  %672 = vst.msk [vmem:[%s671] sm:$0xff] %vm670, %v669
  %s673 = scalar_lea.vmem %s0, 137
  %s674 = smov 3
  %v675 = vld [vmem:[%s673] ss:$16 sm:%s674]
  %s676 = scalar_lea.vmem %s0, 137
  %s677 = smov 12
  %v678 = vld [vmem:[%s676] ss:$16 sm:%s677]
  %vm679 = vcmask 1043458
  %v680 = vsel %vm679, %v678, %v675
  %s681 = scalar_lea.vmem %s0, 137
  %s682 = smov 48
  %v683 = vld [vmem:[%s681] ss:$16 sm:%s682]
  %vm684 = vcmask 1045508
  %v685 = vsel %vm684, %v683, %v680
  %s686 = scalar_lea.vmem %s0, 137
  %s687 = smov 192
  %v688 = vld [vmem:[%s686] ss:$16 sm:%s687]
  %vm689 = vcmask 1047558
  %v690 = vsel %vm689, %v688, %v685
  %691 = vrot.lane.b32.xlu0 %v690, 16
  %v692 = vpop.permute.xlu0 %691
  %vm693 = vcmask 261248
  %s694 = scalar_lea.vmem %s1, 24
  %695 = vst.msk [vmem:[%s694] sm:$0xff] %vm693, %v692

// kernel: decoder_block_forward.1
$region0: #{decoder_block_forward.1}
  #allocation0 [shape = 'u32[]', space=smem, size = 0x4, offset = 0x4, fixed_abs, tag = 'smem constant byte address 0x4 - core index']
  #allocation1 [shape = 'u32[72,128]{1,0:T(1,128)}', space=vmem, size = 0x9000, scoped, tag = 'internal scratch']
  %s0 = inlined_call_operand.vmem [shape: f32[32,128], index: 0, kind: input, shape index: {}]
  %s1 = inlined_call_operand.vmem [shape: f32[3,128,256], index: 1, kind: input, shape index: {}]
  %s2 = inlined_call_operand.vmem [shape: f32[3,256,256], index: 2, kind: input, shape index: {}]
  %s3 = inlined_call_operand.vmem [shape: f32[128,256], index: 3, kind: input, shape index: {}]
  %s4 = inlined_call_operand.vmem [shape: f32[32,32], index: 4, kind: input, shape index: {}]
  %s5 = inlined_call_operand.vmem [shape: f32[32,32], index: 5, kind: input, shape index: {}]
  %s6 = inlined_call_operand.vmem [shape: f32[256,16], index: 6, kind: input, shape index: {}]
  %s7 = inlined_call_operand.vmem [shape: f32[16,256], index: 7, kind: input, shape index: {}]
  %s8 = inlined_call_operand.vmem [shape: f32[1,256], index: 8, kind: input, shape index: {}]
  %s9 = inlined_call_operand.vmem [shape: f32[1,16], index: 9, kind: input, shape index: {}]
  %s10 = inlined_call_operand.vmem [shape: f32[1,16], index: 10, kind: input, shape index: {}]
  %s11 = inlined_call_operand.vmem [shape: f32[1,256], index: 11, kind: input, shape index: {}]
  %s12 = inlined_call_operand.vmem [shape: f32[1,16], index: 12, kind: input, shape index: {}]
  %s13 = inlined_call_operand.vmem [shape: f32[1,16], index: 13, kind: input, shape index: {}]
  %s14 = inlined_call_operand.vmem [shape: f32[1,256], index: 14, kind: input, shape index: {}]
  %s15 = inlined_call_operand.vmem [shape: f32[32,256], index: 15, kind: output, shape index: {}]
  %s16 = sld [smem:[#allocation0]]
  $region70: #{decoder_block_forward.1} parent=0
    _
  %s18 = ssub.s32 1, %s16
  %s19 = scalar_select 0, %s18, %s16
  // Predicated region
  $region2: #{decoder_block_forward.1} parent=0 // pred_check
    _
  $region3: #{decoder_block_forward.1} parent=0 // pred_check_branch
    %21 = sbr.rel (0) target = $region5
  $region4: #{decoder_block_forward.1} parent=0 // pred_region
    _
  $region5: #{decoder_block_forward.1} parent=0 // pred_fallthru
    _
  // Predicated region
  $region6: #{decoder_block_forward.1} parent=0 // pred_check
    _
  $region7: #{decoder_block_forward.1} parent=0 // pred_check_branch
    %23 = sbr.rel (0) target = $region9
  $region8: #{decoder_block_forward.1} parent=0 // pred_region
    _
  $region9: #{decoder_block_forward.1} parent=0 // pred_fallthru
    _
  // Predicated region
  $region10: #{decoder_block_forward.1} parent=0 // pred_check
    _
  $region11: #{decoder_block_forward.1} parent=0 // pred_check_branch
    %25 = sbr.rel (0) target = $region13
  $region12: #{decoder_block_forward.1} parent=0 // pred_region
    _
  $region13: #{decoder_block_forward.1} parent=0 // pred_fallthru
    _
  // Predicated region
  $region14: #{decoder_block_forward.1} parent=0 // pred_check
    _
  $region15: #{decoder_block_forward.1} parent=0 // pred_check_branch
    %27 = sbr.rel (0) target = $region17
  $region16: #{decoder_block_forward.1} parent=0 // pred_region
    _
  $region17: #{decoder_block_forward.1} parent=0 // pred_fallthru
    _
  // Predicated region
  $region18: #{decoder_block_forward.1} parent=0 // pred_check
    _
  $region19: #{decoder_block_forward.1} parent=0 // pred_check_branch
    %29 = sbr.rel (0) target = $region21
  $region20: #{decoder_block_forward.1} parent=0 // pred_region
    _
  $region21: #{decoder_block_forward.1} parent=0 // pred_fallthru
    _
  // Predicated region
  $region22: #{decoder_block_forward.1} parent=0 // pred_check
    _
  $region23: #{decoder_block_forward.1} parent=0 // pred_check_branch
    %31 = sbr.rel (0) target = $region25
  $region24: #{decoder_block_forward.1} parent=0 // pred_region
    _
  $region25: #{decoder_block_forward.1} parent=0 // pred_fallthru
    _
  // Predicated region
  $region26: #{decoder_block_forward.1} parent=0 // pred_check
    _
  $region27: #{decoder_block_forward.1} parent=0 // pred_check_branch
    %33 = sbr.rel (0) target = $region29
  $region28: #{decoder_block_forward.1} parent=0 // pred_region
    _
  $region29: #{decoder_block_forward.1} parent=0 // pred_fallthru
    _
  // Predicated region
  $region30: #{decoder_block_forward.1} parent=0 // pred_check
    _
  $region31: #{decoder_block_forward.1} parent=0 // pred_check_branch
    %35 = sbr.rel (0) target = $region33
  $region32: #{decoder_block_forward.1} parent=0 // pred_region
    _
  $region33: #{decoder_block_forward.1} parent=0 // pred_fallthru
    _
  // Predicated region
  $region34: #{decoder_block_forward.1} parent=0 // pred_check
    _
  $region35: #{decoder_block_forward.1} parent=0 // pred_check_branch
    %37 = sbr.rel (0) target = $region37
  $region36: #{decoder_block_forward.1} parent=0 // pred_region
    _
  $region37: #{decoder_block_forward.1} parent=0 // pred_fallthru
    _
  // Predicated region
  $region38: #{decoder_block_forward.1} parent=0 // pred_check
    _
  $region39: #{decoder_block_forward.1} parent=0 // pred_check_branch
    %39 = sbr.rel (0) target = $region41
  $region40: #{decoder_block_forward.1} parent=0 // pred_region
    _
  $region41: #{decoder_block_forward.1} parent=0 // pred_fallthru
    _
  // Predicated region
  $region42: #{decoder_block_forward.1} parent=0 // pred_check
    _
  $region43: #{decoder_block_forward.1} parent=0 // pred_check_branch
    %41 = sbr.rel (0) target = $region45
  $region44: #{decoder_block_forward.1} parent=0 // pred_region
    _
  $region45: #{decoder_block_forward.1} parent=0 // pred_fallthru
    _
  // Predicated region
  $region46: #{decoder_block_forward.1} parent=0 // pred_check
    _
  $region47: #{decoder_block_forward.1} parent=0 // pred_check_branch
    %43 = sbr.rel (0) target = $region49
  $region48: #{decoder_block_forward.1} parent=0 // pred_region
    _
  $region49: #{decoder_block_forward.1} parent=0 // pred_fallthru
    _
  // Predicated region
  $region50: #{decoder_block_forward.1} parent=0 // pred_check
    _
  $region51: #{decoder_block_forward.1} parent=0 // pred_check_branch
    %45 = sbr.rel (0) target = $region53
  $region52: #{decoder_block_forward.1} parent=0 // pred_region
    _
  $region53: #{decoder_block_forward.1} parent=0 // pred_fallthru
    _
  // Predicated region
  $region54: #{decoder_block_forward.1} parent=0 // pred_check
    _
  $region55: #{decoder_block_forward.1} parent=0 // pred_check_branch
    %47 = sbr.rel (0) target = $region57
  $region56: #{decoder_block_forward.1} parent=0 // pred_region
    _
  $region57: #{decoder_block_forward.1} parent=0 // pred_fallthru
    _
  // Predicated region
  $region58: #{decoder_block_forward.1} parent=0 // pred_check
    _
  $region59: #{decoder_block_forward.1} parent=0 // pred_check_branch
    %49 = sbr.rel (0) target = $region61
  $region60: #{decoder_block_forward.1} parent=0 // pred_region
    _
  $region61: #{decoder_block_forward.1} parent=0 // pred_fallthru
    _
  %v50 = vld [vmem:[%s0] sm:$0xff]
  %v51 = vld [vmem:[%s0 + $0x8] sm:$0xff]
  %v52 = vld [vmem:[%s0 + $0x10] sm:$0xff]
  %v53 = vld [vmem:[%s0 + $0x18] sm:$0xff]
  %v54 = vld [vmem:[%s4] sm:$0xff]
  %v55 = vld [vmem:[%s4 + $0x8] sm:$0xff]
  %v56 = vld [vmem:[%s4 + $0x10] sm:$0xff]
  %v57 = vld [vmem:[%s4 + $0x18] sm:$0xff]
  %v58 = vld [vmem:[%s5] sm:$0xff]
  %v59 = vld [vmem:[%s5 + $0x8] sm:$0xff]
  %v60 = vld [vmem:[%s5 + $0x10] sm:$0xff]
  %v61 = vld [vmem:[%s5 + $0x18] sm:$0xff]
  %v62 = vld [vmem:[%s6] sm:$0xff]
  %v63 = vld [vmem:[%s6 + $0x8] sm:$0xff]
  %v64 = vld [vmem:[%s6 + $0x10] sm:$0xff]
  %v65 = vld [vmem:[%s6 + $0x18] sm:$0xff]
  %v66 = vld [vmem:[%s6 + $0x20] sm:$0xff]
  %v67 = vld [vmem:[%s6 + $0x28] sm:$0xff]
  %v68 = vld [vmem:[%s6 + $0x30] sm:$0xff]
  %v69 = vld [vmem:[%s6 + $0x38] sm:$0xff]
  %v70 = vld [vmem:[%s6 + $0x40] sm:$0xff]
  %v71 = vld [vmem:[%s6 + $0x48] sm:$0xff]
  %v72 = vld [vmem:[%s6 + $0x50] sm:$0xff]
  %v73 = vld [vmem:[%s6 + $0x58] sm:$0xff]
  %v74 = vld [vmem:[%s6 + $0x60] sm:$0xff]
  %v75 = vld [vmem:[%s6 + $0x68] sm:$0xff]
  %v76 = vld [vmem:[%s6 + $0x70] sm:$0xff]
  %v77 = vld [vmem:[%s6 + $0x78] sm:$0xff]
  %v78 = vld [vmem:[%s6 + $0x80] sm:$0xff]
  %v79 = vld [vmem:[%s6 + $0x88] sm:$0xff]
  %v80 = vld [vmem:[%s6 + $0x90] sm:$0xff]
  %v81 = vld [vmem:[%s6 + $0x98] sm:$0xff]
  %v82 = vld [vmem:[%s6 + $0xa0] sm:$0xff]
  %v83 = vld [vmem:[%s6 + $0xa8] sm:$0xff]
  %v84 = vld [vmem:[%s6 + $0xb0] sm:$0xff]
  %v85 = vld [vmem:[%s6 + $0xb8] sm:$0xff]
  %v86 = vld [vmem:[%s6 + $0xc0] sm:$0xff]
  %v87 = vld [vmem:[%s6 + $0xc8] sm:$0xff]
  %v88 = vld [vmem:[%s6 + $0xd0] sm:$0xff]
  %v89 = vld [vmem:[%s6 + $0xd8] sm:$0xff]
  %v90 = vld [vmem:[%s6 + $0xe0] sm:$0xff]
  %v91 = vld [vmem:[%s6 + $0xe8] sm:$0xff]
  %v92 = vld [vmem:[%s6 + $0xf0] sm:$0xff]
  %v93 = vld [vmem:[%s6 + $0xf8] sm:$0xff]
  %v94 = vld [vmem:[%s7] sm:$0xff]
  %v95 = vld [vmem:[%s7 + $0x8] sm:$0xff]
  %v96 = vld [vmem:[%s7 + $0x10] sm:$0xff]
  %v97 = vld [vmem:[%s7 + $0x18] sm:$0xff]
  %v98 = vld [vmem:[%s8] sm:$0x3]
  %v99 = vld [vmem:[%s1] sm:$0xff]
  %v100 = vld [vmem:[%s1 + $0x8] sm:$0xff]
  %v101 = vld [vmem:[%s1 + $0x10] sm:$0xff]
  %v102 = vld [vmem:[%s1 + $0x18] sm:$0xff]
  %v103 = vld [vmem:[%s1 + $0x20] sm:$0xff]
  %v104 = vld [vmem:[%s1 + $0x28] sm:$0xff]
  %v105 = vld [vmem:[%s1 + $0x30] sm:$0xff]
  %v106 = vld [vmem:[%s1 + $0x38] sm:$0xff]
  %v107 = vld [vmem:[%s1 + $0x40] sm:$0xff]
  %v108 = vld [vmem:[%s1 + $0x48] sm:$0xff]
  %v109 = vld [vmem:[%s1 + $0x50] sm:$0xff]
  %v110 = vld [vmem:[%s1 + $0x58] sm:$0xff]
  %v111 = vld [vmem:[%s1 + $0x60] sm:$0xff]
  %v112 = vld [vmem:[%s1 + $0x68] sm:$0xff]
  %v113 = vld [vmem:[%s1 + $0x70] sm:$0xff]
  %v114 = vld [vmem:[%s1 + $0x78] sm:$0xff]
  %v115 = vld [vmem:[%s1 + $0x80] sm:$0xff]
  %v116 = vld [vmem:[%s1 + $0x88] sm:$0xff]
  %v117 = vld [vmem:[%s1 + $0x90] sm:$0xff]
  %v118 = vld [vmem:[%s1 + $0x98] sm:$0xff]
  %v119 = vld [vmem:[%s1 + $0xa0] sm:$0xff]
  %v120 = vld [vmem:[%s1 + $0xa8] sm:$0xff]
  %v121 = vld [vmem:[%s1 + $0xb0] sm:$0xff]
  %v122 = vld [vmem:[%s1 + $0xb8] sm:$0xff]
  %v123 = vld [vmem:[%s1 + $0xc0] sm:$0xff]
  %v124 = vld [vmem:[%s1 + $0xc8] sm:$0xff]
  %v125 = vld [vmem:[%s1 + $0xd0] sm:$0xff]
  %v126 = vld [vmem:[%s1 + $0xd8] sm:$0xff]
  %v127 = vld [vmem:[%s1 + $0xe0] sm:$0xff]
  %v128 = vld [vmem:[%s1 + $0xe8] sm:$0xff]
  %v129 = vld [vmem:[%s1 + $0xf0] sm:$0xff]
  %v130 = vld [vmem:[%s1 + $0xf8] sm:$0xff]
  %131 = vmatpush.msra.mxu0 %v129
  %132 = vmatpush.msra.mxu0 %v127
  %133 = vmatpush.msra.mxu0 %v125
  %134 = vmatpush.msra.mxu0 %v123
  %135 = vmatpush.msra.mxu0 %v121
  %136 = vmatpush.msra.mxu0 %v119
  %137 = vmatpush.msra.mxu0 %v117
  %138 = vmatpush.msra.mxu0 %v115
  %139 = vmatpush.msra.mxu0 %v113
  %140 = vmatpush.msra.mxu0 %v111
  %141 = vmatpush.msra.mxu0 %v109
  %142 = vmatpush.msra.mxu0 %v107
  %143 = vmatpush.msra.mxu0 %v105
  %144 = vmatpush.msra.mxu0 %v103
  %145 = vmatpush.msra.mxu0 %v101
  %146 = vmatpush.msra.mxu0 %v99
  %147 = vmatmul.f32.gmra.mxu0 %v50
  %v148 = vpop.f32.mrf.mxu0
  %v149 = vadd.f32 0.0, %v148
  %150 = vmatmul.f32.gmra.mxu0 %v51
  %v151 = vpop.f32.mrf.mxu0
  %v152 = vadd.f32 0.0, %v151
  %153 = vmatmul.f32.gmra.mxu0 %v52
  %v154 = vpop.f32.mrf.mxu0
  %v155 = vadd.f32 0.0, %v154
  %156 = vmatmul.f32.gmra.mxu0 %v53
  %v157 = vpop.f32.mrf.mxu0
  %v158 = vadd.f32 0.0, %v157
  %159 = vdwg.mxu0
  %160 = vmatpush.msra.mxu0 %v130
  %161 = vmatpush.msra.mxu0 %v128
  %162 = vmatpush.msra.mxu0 %v126
  %163 = vmatpush.msra.mxu0 %v124
  %164 = vmatpush.msra.mxu0 %v122
  %165 = vmatpush.msra.mxu0 %v120
  %166 = vmatpush.msra.mxu0 %v118
  %167 = vmatpush.msra.mxu0 %v116
  %168 = vmatpush.msra.mxu0 %v114
  %169 = vmatpush.msra.mxu0 %v112
  %170 = vmatpush.msra.mxu0 %v110
  %171 = vmatpush.msra.mxu0 %v108
  %172 = vmatpush.msra.mxu0 %v106
  %173 = vmatpush.msra.mxu0 %v104
  %174 = vmatpush.msra.mxu0 %v102
  %175 = vmatpush.msra.mxu0 %v100
  %176 = vmatmul.f32.gmra.mxu0 %v50
  %v177 = vpop.f32.mrf.mxu0
  %v178 = vadd.f32 0.0, %v177
  %179 = vmatmul.f32.gmra.mxu0 %v51
  %v180 = vpop.f32.mrf.mxu0
  %v181 = vadd.f32 0.0, %v180
  %182 = vmatmul.f32.gmra.mxu0 %v52
  %v183 = vpop.f32.mrf.mxu0
  %v184 = vadd.f32 0.0, %v183
  %185 = vmatmul.f32.gmra.mxu0 %v53
  %v186 = vpop.f32.mrf.mxu0
  %v187 = vadd.f32 0.0, %v186
  %188 = vdwg.mxu0
  %s189 = scalar_lea.vmem %s1, 256
  %v190 = vld [vmem:[%s189] sm:$0xff]
  %v191 = vld [vmem:[%s189 + $0x8] sm:$0xff]
  %v192 = vld [vmem:[%s189 + $0x10] sm:$0xff]
  %v193 = vld [vmem:[%s189 + $0x18] sm:$0xff]
  %v194 = vld [vmem:[%s189 + $0x20] sm:$0xff]
  %v195 = vld [vmem:[%s189 + $0x28] sm:$0xff]
  %v196 = vld [vmem:[%s189 + $0x30] sm:$0xff]
  %v197 = vld [vmem:[%s189 + $0x38] sm:$0xff]
  %v198 = vld [vmem:[%s189 + $0x40] sm:$0xff]
  %v199 = vld [vmem:[%s189 + $0x48] sm:$0xff]
  %v200 = vld [vmem:[%s189 + $0x50] sm:$0xff]
  %v201 = vld [vmem:[%s189 + $0x58] sm:$0xff]
  %v202 = vld [vmem:[%s189 + $0x60] sm:$0xff]
  %v203 = vld [vmem:[%s189 + $0x68] sm:$0xff]
  %v204 = vld [vmem:[%s189 + $0x70] sm:$0xff]
  %v205 = vld [vmem:[%s189 + $0x78] sm:$0xff]
  %v206 = vld [vmem:[%s189 + $0x80] sm:$0xff]
  %v207 = vld [vmem:[%s189 + $0x88] sm:$0xff]
  %v208 = vld [vmem:[%s189 + $0x90] sm:$0xff]
  %v209 = vld [vmem:[%s189 + $0x98] sm:$0xff]
  %v210 = vld [vmem:[%s189 + $0xa0] sm:$0xff]
  %v211 = vld [vmem:[%s189 + $0xa8] sm:$0xff]
  %v212 = vld [vmem:[%s189 + $0xb0] sm:$0xff]
  %v213 = vld [vmem:[%s189 + $0xb8] sm:$0xff]
  %v214 = vld [vmem:[%s189 + $0xc0] sm:$0xff]
  %v215 = vld [vmem:[%s189 + $0xc8] sm:$0xff]
  %v216 = vld [vmem:[%s189 + $0xd0] sm:$0xff]
  %v217 = vld [vmem:[%s189 + $0xd8] sm:$0xff]
  %v218 = vld [vmem:[%s189 + $0xe0] sm:$0xff]
  %v219 = vld [vmem:[%s189 + $0xe8] sm:$0xff]
  %v220 = vld [vmem:[%s189 + $0xf0] sm:$0xff]
  %v221 = vld [vmem:[%s189 + $0xf8] sm:$0xff]
  %s222 = scalar_lea.vmem %s1, 512
  %v223 = vld [vmem:[%s222] sm:$0xff]
  %v224 = vld [vmem:[%s222 + $0x8] sm:$0xff]
  %v225 = vld [vmem:[%s222 + $0x10] sm:$0xff]
  %v226 = vld [vmem:[%s222 + $0x18] sm:$0xff]
  %v227 = vld [vmem:[%s222 + $0x20] sm:$0xff]
  %v228 = vld [vmem:[%s222 + $0x28] sm:$0xff]
  %v229 = vld [vmem:[%s222 + $0x30] sm:$0xff]
  %v230 = vld [vmem:[%s222 + $0x38] sm:$0xff]
  %v231 = vld [vmem:[%s222 + $0x40] sm:$0xff]
  %v232 = vld [vmem:[%s222 + $0x48] sm:$0xff]
  %v233 = vld [vmem:[%s222 + $0x50] sm:$0xff]
  %v234 = vld [vmem:[%s222 + $0x58] sm:$0xff]
  %v235 = vld [vmem:[%s222 + $0x60] sm:$0xff]
  %v236 = vld [vmem:[%s222 + $0x68] sm:$0xff]
  %v237 = vld [vmem:[%s222 + $0x70] sm:$0xff]
  %v238 = vld [vmem:[%s222 + $0x78] sm:$0xff]
  %v239 = vld [vmem:[%s222 + $0x80] sm:$0xff]
  %v240 = vld [vmem:[%s222 + $0x88] sm:$0xff]
  %v241 = vld [vmem:[%s222 + $0x90] sm:$0xff]
  %v242 = vld [vmem:[%s222 + $0x98] sm:$0xff]
  %v243 = vld [vmem:[%s222 + $0xa0] sm:$0xff]
  %v244 = vld [vmem:[%s222 + $0xa8] sm:$0xff]
  %v245 = vld [vmem:[%s222 + $0xb0] sm:$0xff]
  %v246 = vld [vmem:[%s222 + $0xb8] sm:$0xff]
  %v247 = vld [vmem:[%s222 + $0xc0] sm:$0xff]
  %v248 = vld [vmem:[%s222 + $0xc8] sm:$0xff]
  %v249 = vld [vmem:[%s222 + $0xd0] sm:$0xff]
  %v250 = vld [vmem:[%s222 + $0xd8] sm:$0xff]
  %v251 = vld [vmem:[%s222 + $0xe0] sm:$0xff]
  %v252 = vld [vmem:[%s222 + $0xe8] sm:$0xff]
  %v253 = vld [vmem:[%s222 + $0xf0] sm:$0xff]
  %v254 = vld [vmem:[%s222 + $0xf8] sm:$0xff]
  %255 = vmatpush.msra.mxu0 %v253
  %256 = vmatpush.msra.mxu0 %v251
  %257 = vmatpush.msra.mxu0 %v249
  %258 = vmatpush.msra.mxu0 %v247
  %259 = vmatpush.msra.mxu0 %v245
  %260 = vmatpush.msra.mxu0 %v243
  %261 = vmatpush.msra.mxu0 %v241
  %262 = vmatpush.msra.mxu0 %v239
  %263 = vmatpush.msra.mxu0 %v237
  %264 = vmatpush.msra.mxu0 %v235
  %265 = vmatpush.msra.mxu0 %v233
  %266 = vmatpush.msra.mxu0 %v231
  %267 = vmatpush.msra.mxu0 %v229
  %268 = vmatpush.msra.mxu0 %v227
  %269 = vmatpush.msra.mxu0 %v225
  %270 = vmatpush.msra.mxu0 %v223
  %271 = vmatmul.f32.gmra.mxu0 %v50
  %v272 = vpop.f32.mrf.mxu0
  %v273 = vadd.f32 0.0, %v272
  %274 = vmatmul.f32.gmra.mxu0 %v51
  %v275 = vpop.f32.mrf.mxu0
  %v276 = vadd.f32 0.0, %v275
  %277 = vmatmul.f32.gmra.mxu0 %v52
  %v278 = vpop.f32.mrf.mxu0
  %v279 = vadd.f32 0.0, %v278
  %280 = vmatmul.f32.gmra.mxu0 %v53
  %v281 = vpop.f32.mrf.mxu0
  %v282 = vadd.f32 0.0, %v281
  %283 = vdwg.mxu0
  %284 = vmatpush.msra.mxu0 %v254
  %285 = vmatpush.msra.mxu0 %v252
  %286 = vmatpush.msra.mxu0 %v250
  %287 = vmatpush.msra.mxu0 %v248
  %288 = vmatpush.msra.mxu0 %v246
  %289 = vmatpush.msra.mxu0 %v244
  %290 = vmatpush.msra.mxu0 %v242
  %291 = vmatpush.msra.mxu0 %v240
  %292 = vmatpush.msra.mxu0 %v238
  %293 = vmatpush.msra.mxu0 %v236
  %294 = vmatpush.msra.mxu0 %v234
  %295 = vmatpush.msra.mxu0 %v232
  %296 = vmatpush.msra.mxu0 %v230
  %297 = vmatpush.msra.mxu0 %v228
  %298 = vmatpush.msra.mxu0 %v226
  %299 = vmatpush.msra.mxu0 %v224
  %300 = vmatmul.f32.gmra.mxu0 %v50
  %v301 = vpop.f32.mrf.mxu0
  %v302 = vadd.f32 0.0, %v301
  %303 = vmatmul.f32.gmra.mxu0 %v51
  %v304 = vpop.f32.mrf.mxu0
  %v305 = vadd.f32 0.0, %v304
  %306 = vmatmul.f32.gmra.mxu0 %v52
  %v307 = vpop.f32.mrf.mxu0
  %v308 = vadd.f32 0.0, %v307
  %309 = vmatmul.f32.gmra.mxu0 %v53
  %v310 = vpop.f32.mrf.mxu0
  %v311 = vadd.f32 0.0, %v310
  %312 = vdwg.mxu0
  %vm313 = vcmask 261120
  %v315 = vsel %vm313, %v54, 0
  %v318 = vsel %vm313, %v55, 0
  %v321 = vsel %vm313, %v56, 0
  %v324 = vsel %vm313, %v57, 0
  %326 = vmatpush.msra.mxu0 0.0
  %327 = vmatpush.msra.mxu0 0.0
  %328 = vmatpush.msra.mxu0 0.0
  %329 = vmatpush.msra.mxu0 0.0
  %330 = vmatpush.msra.mxu0 0.0
  %331 = vmatpush.msra.mxu0 0.0
  %332 = vmatpush.msra.mxu0 0.0
  %333 = vmatpush.msra.mxu0 0.0
  %334 = vmatpush.msra.mxu0 0.0
  %335 = vmatpush.msra.mxu0 0.0
  %336 = vmatpush.msra.mxu0 0.0
  %337 = vmatpush.msra.mxu0 0.0
  %338 = vmatpush.msra.mxu0 %v158
  %339 = vmatpush.msra.mxu0 %v155
  %340 = vmatpush.msra.mxu0 %v152
  %341 = vmatpush.msra.mxu0 %v149
  %342 = vmatmul.f32.gmra.mxu0 %v315
  %v343 = vpop.f32.mrf.mxu0
  %v344 = vadd.f32 0.0, %v343
  %345 = vmatmul.f32.gmra.mxu0 %v318
  %v346 = vpop.f32.mrf.mxu0
  %v347 = vadd.f32 0.0, %v346
  %348 = vmatmul.f32.gmra.mxu0 %v321
  %v349 = vpop.f32.mrf.mxu0
  %v350 = vadd.f32 0.0, %v349
  %351 = vmatmul.f32.gmra.mxu0 %v324
  %v352 = vpop.f32.mrf.mxu0
  %v353 = vadd.f32 0.0, %v352
  %354 = vdwg.mxu0
  %355 = vmatpush.msra.mxu0 0.0
  %356 = vmatpush.msra.mxu0 0.0
  %357 = vmatpush.msra.mxu0 0.0
  %358 = vmatpush.msra.mxu0 0.0
  %359 = vmatpush.msra.mxu0 0.0
  %360 = vmatpush.msra.mxu0 0.0
  %361 = vmatpush.msra.mxu0 0.0
  %362 = vmatpush.msra.mxu0 0.0
  %363 = vmatpush.msra.mxu0 0.0
  %364 = vmatpush.msra.mxu0 0.0
  %365 = vmatpush.msra.mxu0 0.0
  %366 = vmatpush.msra.mxu0 0.0
  %367 = vmatpush.msra.mxu0 %v187
  %368 = vmatpush.msra.mxu0 %v184
  %369 = vmatpush.msra.mxu0 %v181
  %370 = vmatpush.msra.mxu0 %v178
  %371 = vmatmul.f32.gmra.mxu0 %v315
  %v372 = vpop.f32.mrf.mxu0
  %v373 = vadd.f32 0.0, %v372
  %374 = vmatmul.f32.gmra.mxu0 %v318
  %v375 = vpop.f32.mrf.mxu0
  %v376 = vadd.f32 0.0, %v375
  %377 = vmatmul.f32.gmra.mxu0 %v321
  %v378 = vpop.f32.mrf.mxu0
  %v379 = vadd.f32 0.0, %v378
  %380 = vmatmul.f32.gmra.mxu0 %v324
  %v381 = vpop.f32.mrf.mxu0
  %v382 = vadd.f32 0.0, %v381
  %383 = vdwg.mxu0
  %384 = vmatpush.msra.mxu0 %v220
  %385 = vmatpush.msra.mxu0 %v218
  %386 = vmatpush.msra.mxu0 %v216
  %387 = vmatpush.msra.mxu0 %v214
  %388 = vmatpush.msra.mxu0 %v212
  %389 = vmatpush.msra.mxu0 %v210
  %390 = vmatpush.msra.mxu0 %v208
  %391 = vmatpush.msra.mxu0 %v206
  %392 = vmatpush.msra.mxu0 %v204
  %393 = vmatpush.msra.mxu0 %v202
  %394 = vmatpush.msra.mxu0 %v200
  %395 = vmatpush.msra.mxu0 %v198
  %396 = vmatpush.msra.mxu0 %v196
  %397 = vmatpush.msra.mxu0 %v194
  %398 = vmatpush.msra.mxu0 %v192
  %399 = vmatpush.msra.mxu0 %v190
  %400 = vmatmul.f32.gmra.mxu0 %v50
  %v401 = vpop.f32.mrf.mxu0
  %v402 = vadd.f32 %v344, %v401
  %403 = vmatmul.f32.gmra.mxu0 %v51
  %v404 = vpop.f32.mrf.mxu0
  %v405 = vadd.f32 %v347, %v404
  %406 = vmatmul.f32.gmra.mxu0 %v52
  %v407 = vpop.f32.mrf.mxu0
  %v408 = vadd.f32 %v350, %v407
  %409 = vmatmul.f32.gmra.mxu0 %v53
  %v410 = vpop.f32.mrf.mxu0
  %v411 = vadd.f32 %v353, %v410
  %412 = vdwg.mxu0
  %413 = vmatpush.msra.mxu0 %v221
  %414 = vmatpush.msra.mxu0 %v219
  %415 = vmatpush.msra.mxu0 %v217
  %416 = vmatpush.msra.mxu0 %v215
  %417 = vmatpush.msra.mxu0 %v213
  %418 = vmatpush.msra.mxu0 %v211
  %419 = vmatpush.msra.mxu0 %v209
  %420 = vmatpush.msra.mxu0 %v207
  %421 = vmatpush.msra.mxu0 %v205
  %422 = vmatpush.msra.mxu0 %v203
  %423 = vmatpush.msra.mxu0 %v201
  %424 = vmatpush.msra.mxu0 %v199
  %425 = vmatpush.msra.mxu0 %v197
  %426 = vmatpush.msra.mxu0 %v195
  %427 = vmatpush.msra.mxu0 %v193
  %428 = vmatpush.msra.mxu0 %v191
  %429 = vmatmul.f32.gmra.mxu0 %v50
  %v430 = vpop.f32.mrf.mxu0
  %v431 = vadd.f32 %v373, %v430
  %432 = vmatmul.f32.gmra.mxu0 %v51
  %v433 = vpop.f32.mrf.mxu0
  %v434 = vadd.f32 %v376, %v433
  %435 = vmatmul.f32.gmra.mxu0 %v52
  %v436 = vpop.f32.mrf.mxu0
  %v437 = vadd.f32 %v379, %v436
  %438 = vmatmul.f32.gmra.mxu0 %v53
  %v439 = vpop.f32.mrf.mxu0
  %v440 = vadd.f32 %v382, %v439
  %441 = vdwg.mxu0
  %v443 = vsel %vm313, %v58, 0
  %v446 = vsel %vm313, %v59, 0
  %v449 = vsel %vm313, %v60, 0
  %v452 = vsel %vm313, %v61, 0
  %454 = vmatpush.msra.mxu0 0.0
  %455 = vmatpush.msra.mxu0 0.0
  %456 = vmatpush.msra.mxu0 0.0
  %457 = vmatpush.msra.mxu0 0.0
  %458 = vmatpush.msra.mxu0 0.0
  %459 = vmatpush.msra.mxu0 0.0
  %460 = vmatpush.msra.mxu0 0.0
  %461 = vmatpush.msra.mxu0 0.0
  %462 = vmatpush.msra.mxu0 0.0
  %463 = vmatpush.msra.mxu0 0.0
  %464 = vmatpush.msra.mxu0 0.0
  %465 = vmatpush.msra.mxu0 0.0
  %466 = vmatpush.msra.mxu0 %v282
  %467 = vmatpush.msra.mxu0 %v279
  %468 = vmatpush.msra.mxu0 %v276
  %469 = vmatpush.msra.mxu0 %v273
  %470 = vmatmul.f32.gmra.mxu0 %v443
  %v471 = vpop.f32.mrf.mxu0
  %v472 = vadd.f32 0.0, %v471
  %473 = vmatmul.f32.gmra.mxu0 %v446
  %v474 = vpop.f32.mrf.mxu0
  %v475 = vadd.f32 0.0, %v474
  %476 = vmatmul.f32.gmra.mxu0 %v449
  %v477 = vpop.f32.mrf.mxu0
  %v478 = vadd.f32 0.0, %v477
  %479 = vmatmul.f32.gmra.mxu0 %v452
  %v480 = vpop.f32.mrf.mxu0
  %v481 = vadd.f32 0.0, %v480
  %482 = vdwg.mxu0
  %483 = vmatpush.msra.mxu0 0.0
  %484 = vmatpush.msra.mxu0 0.0
  %485 = vmatpush.msra.mxu0 0.0
  %486 = vmatpush.msra.mxu0 0.0
  %487 = vmatpush.msra.mxu0 0.0
  %488 = vmatpush.msra.mxu0 0.0
  %489 = vmatpush.msra.mxu0 0.0
  %490 = vmatpush.msra.mxu0 0.0
  %491 = vmatpush.msra.mxu0 0.0
  %492 = vmatpush.msra.mxu0 0.0
  %493 = vmatpush.msra.mxu0 0.0
  %494 = vmatpush.msra.mxu0 0.0
  %495 = vmatpush.msra.mxu0 %v311
  %496 = vmatpush.msra.mxu0 %v308
  %497 = vmatpush.msra.mxu0 %v305
  %498 = vmatpush.msra.mxu0 %v302
  %499 = vmatmul.f32.gmra.mxu0 %v443
  %v500 = vpop.f32.mrf.mxu0
  %v501 = vadd.f32 0.0, %v500
  %502 = vmatmul.f32.gmra.mxu0 %v446
  %v503 = vpop.f32.mrf.mxu0
  %v504 = vadd.f32 0.0, %v503
  %505 = vmatmul.f32.gmra.mxu0 %v449
  %v506 = vpop.f32.mrf.mxu0
  %v507 = vadd.f32 0.0, %v506
  %508 = vmatmul.f32.gmra.mxu0 %v452
  %v509 = vpop.f32.mrf.mxu0
  %v510 = vadd.f32 0.0, %v509
  %511 = vdwg.mxu0
  %v512 = vadd.f32 %v402, %v472
  %v513 = vadd.f32 %v431, %v501
  %v514 = vadd.f32 %v405, %v475
  %v515 = vadd.f32 %v434, %v504
  %v516 = vadd.f32 %v408, %v478
  %v517 = vadd.f32 %v437, %v507
  %v518 = vadd.f32 %v411, %v481
  %v519 = vadd.f32 %v440, %v510
  %v521 = vperm.slane %v98, 0
  %v522 = vperm.slane %v98, 1
  %v525 = vadd.f32 %v512, %v521
  %v526 = vadd.f32 %v513, %v522
  %v527 = vadd.f32 %v514, %v521
  %v528 = vadd.f32 %v515, %v522
  %v529 = vadd.f32 %v516, %v521
  %v530 = vadd.f32 %v517, %v522
  %v531 = vadd.f32 %v518, %v521
  %v532 = vadd.f32 %v519, %v522
  %v533 = vld [vmem:[%s9] sm:$0x1]
  %v534 = vld [vmem:[%s10] sm:$0x1]
  %v535 = vadd.f32 %v525, %v527
  %v536 = vadd.f32 %v535, %v529
  %v537 = vadd.f32 %v536, %v531
  %v538 = vrot.slane %v537, 4
  %v539 = vadd.f32 %v537, %v538
  %v540 = vrot.slane %v539, 2
  %v541 = vadd.f32 %v539, %v540
  %v542 = vrot.slane %v541, 1
  %v543 = vadd.f32 %v541, %v542
  %v544 = vadd.f32 %v526, %v528
  %v545 = vadd.f32 %v544, %v530
  %v546 = vadd.f32 %v545, %v532
  %v547 = vrot.slane %v546, 4
  %v548 = vadd.f32 %v546, %v547
  %v549 = vrot.slane %v548, 2
  %v550 = vadd.f32 %v548, %v549
  %v551 = vrot.slane %v550, 1
  %v552 = vadd.f32 %v550, %v551
  %553 = vmatpush.msra.mxu0 %v77
  %554 = vmatpush.msra.mxu0 %v76
  %555 = vmatpush.msra.mxu0 %v75
  %556 = vmatpush.msra.mxu0 %v74
  %557 = vmatpush.msra.mxu0 %v73
  %558 = vmatpush.msra.mxu0 %v72
  %559 = vmatpush.msra.mxu0 %v71
  %560 = vmatpush.msra.mxu0 %v70
  %561 = vmatpush.msra.mxu0 %v69
  %562 = vmatpush.msra.mxu0 %v68
  %563 = vmatpush.msra.mxu0 %v67
  %564 = vmatpush.msra.mxu0 %v66
  %565 = vmatpush.msra.mxu0 %v65
  %566 = vmatpush.msra.mxu0 %v64
  %567 = vmatpush.msra.mxu0 %v63
  %568 = vmatpush.msra.mxu0 %v62
  %569 = vmatmul.f32.gmra.mxu0 %v543
  %v570 = vpop.f32.mrf.mxu0
  %v571 = vadd.f32 0.0, %v570
  %572 = vdwg.mxu0
  %573 = vmatpush.msra.mxu0 %v93
  %574 = vmatpush.msra.mxu0 %v92
  %575 = vmatpush.msra.mxu0 %v91
  %576 = vmatpush.msra.mxu0 %v90
  %577 = vmatpush.msra.mxu0 %v89
  %578 = vmatpush.msra.mxu0 %v88
  %579 = vmatpush.msra.mxu0 %v87
  %580 = vmatpush.msra.mxu0 %v86
  %581 = vmatpush.msra.mxu0 %v85
  %582 = vmatpush.msra.mxu0 %v84
  %583 = vmatpush.msra.mxu0 %v83
  %584 = vmatpush.msra.mxu0 %v82
  %585 = vmatpush.msra.mxu0 %v81
  %586 = vmatpush.msra.mxu0 %v80
  %587 = vmatpush.msra.mxu0 %v79
  %588 = vmatpush.msra.mxu0 %v78
  %589 = vmatmul.f32.gmra.mxu0 %v552
  %v590 = vpop.f32.mrf.mxu0
  %v591 = vadd.f32 %v571, %v590
  %592 = vdwg.mxu0
  %v593 = vmul.f32 %v525, %v525
  %v594 = vmul.f32 %v526, %v526
  %v595 = vmul.f32 %v527, %v527
  %v596 = vmul.f32 %v528, %v528
  %v597 = vmul.f32 %v529, %v529
  %v598 = vmul.f32 %v530, %v530
  %v599 = vmul.f32 %v531, %v531
  %v600 = vmul.f32 %v532, %v532
  %v601 = vadd.f32 %v593, %v595
  %v602 = vadd.f32 %v601, %v597
  %v603 = vadd.f32 %v602, %v599
  %v604 = vrot.slane %v603, 4
  %v605 = vadd.f32 %v603, %v604
  %v606 = vrot.slane %v605, 2
  %v607 = vadd.f32 %v605, %v606
  %v608 = vrot.slane %v607, 1
  %v609 = vadd.f32 %v607, %v608
  %v610 = vadd.f32 %v594, %v596
  %v611 = vadd.f32 %v610, %v598
  %v612 = vadd.f32 %v611, %v600
  %v613 = vrot.slane %v612, 4
  %v614 = vadd.f32 %v612, %v613
  %v615 = vrot.slane %v614, 2
  %v616 = vadd.f32 %v614, %v615
  %v617 = vrot.slane %v616, 1
  %v618 = vadd.f32 %v616, %v617
  %619 = vmatpush.msra.mxu0 %v77
  %620 = vmatpush.msra.mxu0 %v76
  %621 = vmatpush.msra.mxu0 %v75
  %622 = vmatpush.msra.mxu0 %v74
  %623 = vmatpush.msra.mxu0 %v73
  %624 = vmatpush.msra.mxu0 %v72
  %625 = vmatpush.msra.mxu0 %v71
  %626 = vmatpush.msra.mxu0 %v70
  %627 = vmatpush.msra.mxu0 %v69
  %628 = vmatpush.msra.mxu0 %v68
  %629 = vmatpush.msra.mxu0 %v67
  %630 = vmatpush.msra.mxu0 %v66
  %631 = vmatpush.msra.mxu0 %v65
  %632 = vmatpush.msra.mxu0 %v64
  %633 = vmatpush.msra.mxu0 %v63
  %634 = vmatpush.msra.mxu0 %v62
  %635 = vmatmul.f32.gmra.mxu0 %v609
  %v636 = vpop.f32.mrf.mxu0
  %v637 = vadd.f32 0.0, %v636
  %638 = vdwg.mxu0
  %639 = vmatpush.msra.mxu0 %v93
  %640 = vmatpush.msra.mxu0 %v92
  %641 = vmatpush.msra.mxu0 %v91
  %642 = vmatpush.msra.mxu0 %v90
  %643 = vmatpush.msra.mxu0 %v89
  %644 = vmatpush.msra.mxu0 %v88
  %645 = vmatpush.msra.mxu0 %v87
  %646 = vmatpush.msra.mxu0 %v86
  %647 = vmatpush.msra.mxu0 %v85
  %648 = vmatpush.msra.mxu0 %v84
  %649 = vmatpush.msra.mxu0 %v83
  %650 = vmatpush.msra.mxu0 %v82
  %651 = vmatpush.msra.mxu0 %v81
  %652 = vmatpush.msra.mxu0 %v80
  %653 = vmatpush.msra.mxu0 %v79
  %654 = vmatpush.msra.mxu0 %v78
  %655 = vmatmul.f32.gmra.mxu0 %v618
  %v656 = vpop.f32.mrf.mxu0
  %v657 = vadd.f32 %v637, %v656
  %658 = vdwg.mxu0
  %v659 = vrcp.pop 512.0
  %v660 = vmul.f32 512.0, %v659
  %v661 = vsub.f32 1.0, %v660
  %v662 = vmul.f32 %v659, %v661
  %v663 = vadd.f32 %v659, %v662
  %vm664 = vweird.f32 %v659
  %v665 = vsel %vm664, %v659, %v663
  %v666 = vmul.f32 %v591, %v665
  %v667 = vmul.f32 %v657, %v665
  %v668 = vmul.f32 %v666, %v666
  %v669 = vsub.f32 %v667, %v668
  %v670 = vadd.f32 %v669, 1e-05
  %v671 = vrsqrt.pop %v670
  %v672 = vmul.f32 %v671, %v670
  %v673 = vmul.f32 %v672, %v671
  %v674 = vmul.f32 0.5, %v673
  %v675 = vsub.f32 1.5, %v674
  %v676 = vmul.f32 %v671, %v675
  %vm677 = vweird.f32 %v670
  %vm678 = vweird.f32 %v671
  %vm679 = vmor %vm677, %vm678
  %v680 = vsel %vm679, %v671, %v676
  %v681 = vmul.f32 %v533, %v680
  %v682 = vmul.f32 %v666, %v681
  %v683 = vsub.f32 %v534, %v682
  %vm684 = vcmask 130048
  %v686 = vsel %vm684, %v681, 0
  %688 = vmatpush.msra.mxu0 0.0
  %689 = vmatpush.msra.mxu0 0.0
  %690 = vmatpush.msra.mxu0 0.0
  %691 = vmatpush.msra.mxu0 0.0
  %692 = vmatpush.msra.mxu0 0.0
  %693 = vmatpush.msra.mxu0 0.0
  %694 = vmatpush.msra.mxu0 0.0
  %695 = vmatpush.msra.mxu0 0.0
  %696 = vmatpush.msra.mxu0 0.0
  %697 = vmatpush.msra.mxu0 0.0
  %698 = vmatpush.msra.mxu0 0.0
  %699 = vmatpush.msra.mxu0 0.0
  %700 = vmatpush.msra.mxu0 0.0
  %701 = vmatpush.msra.mxu0 0.0
  %702 = vmatpush.msra.mxu0 %v96
  %703 = vmatpush.msra.mxu0 %v94
  %704 = vmatmul.f32.gmra.mxu0 %v686
  %v705 = vpop.f32.mrf.mxu0
  %v706 = vadd.f32 0.0, %v705
  %707 = vdwg.mxu0
  %708 = vmatpush.msra.mxu0 0.0
  %709 = vmatpush.msra.mxu0 0.0
  %710 = vmatpush.msra.mxu0 0.0
  %711 = vmatpush.msra.mxu0 0.0
  %712 = vmatpush.msra.mxu0 0.0
  %713 = vmatpush.msra.mxu0 0.0
  %714 = vmatpush.msra.mxu0 0.0
  %715 = vmatpush.msra.mxu0 0.0
  %716 = vmatpush.msra.mxu0 0.0
  %717 = vmatpush.msra.mxu0 0.0
  %718 = vmatpush.msra.mxu0 0.0
  %719 = vmatpush.msra.mxu0 0.0
  %720 = vmatpush.msra.mxu0 0.0
  %721 = vmatpush.msra.mxu0 0.0
  %722 = vmatpush.msra.mxu0 %v97
  %723 = vmatpush.msra.mxu0 %v95
  %724 = vmatmul.f32.gmra.mxu0 %v686
  %v725 = vpop.f32.mrf.mxu0
  %v726 = vadd.f32 0.0, %v725
  %727 = vdwg.mxu0
  %v729 = vsel %vm684, %v683, 0
  %731 = vmatpush.msra.mxu0 0.0
  %732 = vmatpush.msra.mxu0 0.0
  %733 = vmatpush.msra.mxu0 0.0
  %734 = vmatpush.msra.mxu0 0.0
  %735 = vmatpush.msra.mxu0 0.0
  %736 = vmatpush.msra.mxu0 0.0
  %737 = vmatpush.msra.mxu0 0.0
  %738 = vmatpush.msra.mxu0 0.0
  %739 = vmatpush.msra.mxu0 0.0
  %740 = vmatpush.msra.mxu0 0.0
  %741 = vmatpush.msra.mxu0 0.0
  %742 = vmatpush.msra.mxu0 0.0
  %743 = vmatpush.msra.mxu0 0.0
  %744 = vmatpush.msra.mxu0 0.0
  %745 = vmatpush.msra.mxu0 %v96
  %746 = vmatpush.msra.mxu0 %v94
  %747 = vmatmul.f32.gmra.mxu0 %v729
  %v748 = vpop.f32.mrf.mxu0
  %v749 = vadd.f32 0.0, %v748
  %750 = vdwg.mxu0
  %751 = vmatpush.msra.mxu0 0.0
  %752 = vmatpush.msra.mxu0 0.0
  %753 = vmatpush.msra.mxu0 0.0
  %754 = vmatpush.msra.mxu0 0.0
  %755 = vmatpush.msra.mxu0 0.0
  %756 = vmatpush.msra.mxu0 0.0
  %757 = vmatpush.msra.mxu0 0.0
  %758 = vmatpush.msra.mxu0 0.0
  %759 = vmatpush.msra.mxu0 0.0
  %760 = vmatpush.msra.mxu0 0.0
  %761 = vmatpush.msra.mxu0 0.0
  %762 = vmatpush.msra.mxu0 0.0
  %763 = vmatpush.msra.mxu0 0.0
  %764 = vmatpush.msra.mxu0 0.0
  %765 = vmatpush.msra.mxu0 %v97
  %766 = vmatpush.msra.mxu0 %v95
  %767 = vmatmul.f32.gmra.mxu0 %v729
  %v768 = vpop.f32.mrf.mxu0
  %v769 = vadd.f32 0.0, %v768
  %770 = vdwg.mxu0
  %v771 = vperm.slane %v706, 0
  %v772 = vperm.slane %v726, 0
  %v773 = vmul.f32 %v525, %v771
  %v774 = vmul.f32 %v526, %v772
  %v775 = vmul.f32 %v527, %v771
  %v776 = vmul.f32 %v528, %v772
  %v777 = vmul.f32 %v529, %v771
  %v778 = vmul.f32 %v530, %v772
  %v779 = vmul.f32 %v531, %v771
  %v780 = vmul.f32 %v532, %v772
  %v781 = vperm.slane %v749, 0
  %v782 = vperm.slane %v769, 0
  %v783 = vadd.f32 %v773, %v781
  %v784 = vadd.f32 %v774, %v782
  %v785 = vadd.f32 %v775, %v781
  %v786 = vadd.f32 %v776, %v782
  %v787 = vadd.f32 %v777, %v781
  %v788 = vadd.f32 %v778, %v782
  %v789 = vadd.f32 %v779, %v781
  %v790 = vadd.f32 %v780, %v782
  %v791 = vmax.f32 %v783, 0.0
  %v792 = vmax.f32 %v784, 0.0
  %v793 = vmax.f32 %v785, 0.0
  %v794 = vmax.f32 %v786, 0.0
  %v795 = vmax.f32 %v787, 0.0
  %v796 = vmax.f32 %v788, 0.0
  %v797 = vmax.f32 %v789, 0.0
  %v798 = vmax.f32 %v790, 0.0
  %v799 = vld [vmem:[%s11] sm:$0x3]
  %v800 = vld [vmem:[%s2] sm:$0xff]
  %v801 = vld [vmem:[%s2 + $0x8] sm:$0xff]
  %v802 = vld [vmem:[%s2 + $0x10] sm:$0xff]
  %v803 = vld [vmem:[%s2 + $0x18] sm:$0xff]
  %v804 = vld [vmem:[%s2 + $0x20] sm:$0xff]
  %v805 = vld [vmem:[%s2 + $0x28] sm:$0xff]
  %v806 = vld [vmem:[%s2 + $0x30] sm:$0xff]
  %v807 = vld [vmem:[%s2 + $0x38] sm:$0xff]
  %v808 = vld [vmem:[%s2 + $0x40] sm:$0xff]
  %v809 = vld [vmem:[%s2 + $0x48] sm:$0xff]
  %v810 = vld [vmem:[%s2 + $0x50] sm:$0xff]
  %v811 = vld [vmem:[%s2 + $0x58] sm:$0xff]
  %v812 = vld [vmem:[%s2 + $0x60] sm:$0xff]
  %v813 = vld [vmem:[%s2 + $0x68] sm:$0xff]
  %v814 = vld [vmem:[%s2 + $0x70] sm:$0xff]
  %v815 = vld [vmem:[%s2 + $0x78] sm:$0xff]
  %v816 = vld [vmem:[%s2 + $0x80] sm:$0xff]
  %v817 = vld [vmem:[%s2 + $0x88] sm:$0xff]
  %v818 = vld [vmem:[%s2 + $0x90] sm:$0xff]
  %v819 = vld [vmem:[%s2 + $0x98] sm:$0xff]
  %v820 = vld [vmem:[%s2 + $0xa0] sm:$0xff]
  %v821 = vld [vmem:[%s2 + $0xa8] sm:$0xff]
  %v822 = vld [vmem:[%s2 + $0xb0] sm:$0xff]
  %v823 = vld [vmem:[%s2 + $0xb8] sm:$0xff]
  %v824 = vld [vmem:[%s2 + $0xc0] sm:$0xff]
  %v825 = vld [vmem:[%s2 + $0xc8] sm:$0xff]
  %v826 = vld [vmem:[%s2 + $0xd0] sm:$0xff]
  %v827 = vld [vmem:[%s2 + $0xd8] sm:$0xff]
  %v828 = vld [vmem:[%s2 + $0xe0] sm:$0xff]
  %v829 = vld [vmem:[%s2 + $0xe8] sm:$0xff]
  %v830 = vld [vmem:[%s2 + $0xf0] sm:$0xff]
  %v831 = vld [vmem:[%s2 + $0xf8] sm:$0xff]
  %v832 = vld [vmem:[%s2 + $0x100] sm:$0xff]
  %v833 = vld [vmem:[%s2 + $0x108] sm:$0xff]
  %v834 = vld [vmem:[%s2 + $0x110] sm:$0xff]
  %v835 = vld [vmem:[%s2 + $0x118] sm:$0xff]
  %v836 = vld [vmem:[%s2 + $0x120] sm:$0xff]
  %v837 = vld [vmem:[%s2 + $0x128] sm:$0xff]
  %v838 = vld [vmem:[%s2 + $0x130] sm:$0xff]
  %v839 = vld [vmem:[%s2 + $0x138] sm:$0xff]
  %v840 = vld [vmem:[%s2 + $0x140] sm:$0xff]
  %v841 = vld [vmem:[%s2 + $0x148] sm:$0xff]
  %v842 = vld [vmem:[%s2 + $0x150] sm:$0xff]
  %v843 = vld [vmem:[%s2 + $0x158] sm:$0xff]
  %v844 = vld [vmem:[%s2 + $0x160] sm:$0xff]
  %v845 = vld [vmem:[%s2 + $0x168] sm:$0xff]
  %v846 = vld [vmem:[%s2 + $0x170] sm:$0xff]
  %v847 = vld [vmem:[%s2 + $0x178] sm:$0xff]
  %v848 = vld [vmem:[%s2 + $0x180] sm:$0xff]
  %v849 = vld [vmem:[%s2 + $0x188] sm:$0xff]
  %v850 = vld [vmem:[%s2 + $0x190] sm:$0xff]
  %v851 = vld [vmem:[%s2 + $0x198] sm:$0xff]
  %v852 = vld [vmem:[%s2 + $0x1a0] sm:$0xff]
  %v853 = vld [vmem:[%s2 + $0x1a8] sm:$0xff]
  %v854 = vld [vmem:[%s2 + $0x1b0] sm:$0xff]
  %v855 = vld [vmem:[%s2 + $0x1b8] sm:$0xff]
  %v856 = vld [vmem:[%s2 + $0x1c0] sm:$0xff]
  %v857 = vld [vmem:[%s2 + $0x1c8] sm:$0xff]
  %v858 = vld [vmem:[%s2 + $0x1d0] sm:$0xff]
  %v859 = vld [vmem:[%s2 + $0x1d8] sm:$0xff]
  %v860 = vld [vmem:[%s2 + $0x1e0] sm:$0xff]
  %v861 = vld [vmem:[%s2 + $0x1e8] sm:$0xff]
  %v862 = vld [vmem:[%s2 + $0x1f0] sm:$0xff]
  %v863 = vld [vmem:[%s2 + $0x1f8] sm:$0xff]
  %864 = vmatpush.msra.mxu0 %v830
  %865 = vmatpush.msra.mxu0 %v828
  %866 = vmatpush.msra.mxu0 %v826
  %867 = vmatpush.msra.mxu0 %v824
  %868 = vmatpush.msra.mxu0 %v822
  %869 = vmatpush.msra.mxu0 %v820
  %870 = vmatpush.msra.mxu0 %v818
  %871 = vmatpush.msra.mxu0 %v816
  %872 = vmatpush.msra.mxu0 %v814
  %873 = vmatpush.msra.mxu0 %v812
  %874 = vmatpush.msra.mxu0 %v810
  %875 = vmatpush.msra.mxu0 %v808
  %876 = vmatpush.msra.mxu0 %v806
  %877 = vmatpush.msra.mxu0 %v804
  %878 = vmatpush.msra.mxu0 %v802
  %879 = vmatpush.msra.mxu0 %v800
  %880 = vmatmul.f32.gmra.mxu0 %v791
  %v881 = vpop.f32.mrf.mxu0
  %v882 = vadd.f32 0.0, %v881
  %883 = vmatmul.f32.gmra.mxu0 %v793
  %v884 = vpop.f32.mrf.mxu0
  %v885 = vadd.f32 0.0, %v884
  %886 = vmatmul.f32.gmra.mxu0 %v795
  %v887 = vpop.f32.mrf.mxu0
  %v888 = vadd.f32 0.0, %v887
  %889 = vmatmul.f32.gmra.mxu0 %v797
  %v890 = vpop.f32.mrf.mxu0
  %v891 = vadd.f32 0.0, %v890
  %892 = vdwg.mxu0
  %893 = vmatpush.msra.mxu0 %v862
  %894 = vmatpush.msra.mxu0 %v860
  %895 = vmatpush.msra.mxu0 %v858
  %896 = vmatpush.msra.mxu0 %v856
  %897 = vmatpush.msra.mxu0 %v854
  %898 = vmatpush.msra.mxu0 %v852
  %899 = vmatpush.msra.mxu0 %v850
  %900 = vmatpush.msra.mxu0 %v848
  %901 = vmatpush.msra.mxu0 %v846
  %902 = vmatpush.msra.mxu0 %v844
  %903 = vmatpush.msra.mxu0 %v842
  %904 = vmatpush.msra.mxu0 %v840
  %905 = vmatpush.msra.mxu0 %v838
  %906 = vmatpush.msra.mxu0 %v836
  %907 = vmatpush.msra.mxu0 %v834
  %908 = vmatpush.msra.mxu0 %v832
  %909 = vmatmul.f32.gmra.mxu0 %v792
  %v910 = vpop.f32.mrf.mxu0
  %v911 = vadd.f32 %v882, %v910
  %912 = vmatmul.f32.gmra.mxu0 %v794
  %v913 = vpop.f32.mrf.mxu0
  %v914 = vadd.f32 %v885, %v913
  %915 = vmatmul.f32.gmra.mxu0 %v796
  %v916 = vpop.f32.mrf.mxu0
  %v917 = vadd.f32 %v888, %v916
  %918 = vmatmul.f32.gmra.mxu0 %v798
  %v919 = vpop.f32.mrf.mxu0
  %v920 = vadd.f32 %v891, %v919
  %921 = vdwg.mxu0
  %922 = vmatpush.msra.mxu0 %v831
  %923 = vmatpush.msra.mxu0 %v829
  %924 = vmatpush.msra.mxu0 %v827
  %925 = vmatpush.msra.mxu0 %v825
  %926 = vmatpush.msra.mxu0 %v823
  %927 = vmatpush.msra.mxu0 %v821
  %928 = vmatpush.msra.mxu0 %v819
  %929 = vmatpush.msra.mxu0 %v817
  %930 = vmatpush.msra.mxu0 %v815
  %931 = vmatpush.msra.mxu0 %v813
  %932 = vmatpush.msra.mxu0 %v811
  %933 = vmatpush.msra.mxu0 %v809
  %934 = vmatpush.msra.mxu0 %v807
  %935 = vmatpush.msra.mxu0 %v805
  %936 = vmatpush.msra.mxu0 %v803
  %937 = vmatpush.msra.mxu0 %v801
  %938 = vmatmul.f32.gmra.mxu0 %v791
  %v939 = vpop.f32.mrf.mxu0
  %v940 = vadd.f32 0.0, %v939
  %941 = vmatmul.f32.gmra.mxu0 %v793
  %v942 = vpop.f32.mrf.mxu0
  %v943 = vadd.f32 0.0, %v942
  %944 = vmatmul.f32.gmra.mxu0 %v795
  %v945 = vpop.f32.mrf.mxu0
  %v946 = vadd.f32 0.0, %v945
  %947 = vmatmul.f32.gmra.mxu0 %v797
  %v948 = vpop.f32.mrf.mxu0
  %v949 = vadd.f32 0.0, %v948
  %950 = vdwg.mxu0
  %951 = vmatpush.msra.mxu0 %v863
  %952 = vmatpush.msra.mxu0 %v861
  %953 = vmatpush.msra.mxu0 %v859
  %954 = vmatpush.msra.mxu0 %v857
  %955 = vmatpush.msra.mxu0 %v855
  %956 = vmatpush.msra.mxu0 %v853
  %957 = vmatpush.msra.mxu0 %v851
  %958 = vmatpush.msra.mxu0 %v849
  %959 = vmatpush.msra.mxu0 %v847
  %960 = vmatpush.msra.mxu0 %v845
  %961 = vmatpush.msra.mxu0 %v843
  %962 = vmatpush.msra.mxu0 %v841
  %963 = vmatpush.msra.mxu0 %v839
  %964 = vmatpush.msra.mxu0 %v837
  %965 = vmatpush.msra.mxu0 %v835
  %966 = vmatpush.msra.mxu0 %v833
  %967 = vmatmul.f32.gmra.mxu0 %v792
  %v968 = vpop.f32.mrf.mxu0
  %v969 = vadd.f32 %v940, %v968
  %970 = vmatmul.f32.gmra.mxu0 %v794
  %v971 = vpop.f32.mrf.mxu0
  %v972 = vadd.f32 %v943, %v971
  %973 = vmatmul.f32.gmra.mxu0 %v796
  %v974 = vpop.f32.mrf.mxu0
  %v975 = vadd.f32 %v946, %v974
  %976 = vmatmul.f32.gmra.mxu0 %v798
  %v977 = vpop.f32.mrf.mxu0
  %v978 = vadd.f32 %v949, %v977
  %979 = vdwg.mxu0
  %s980 = scalar_lea.vmem %s2, 512
  %v981 = vld [vmem:[%s980] sm:$0xff]
  %v982 = vld [vmem:[%s980 + $0x8] sm:$0xff]
  %v983 = vld [vmem:[%s980 + $0x10] sm:$0xff]
  %v984 = vld [vmem:[%s980 + $0x18] sm:$0xff]
  %v985 = vld [vmem:[%s980 + $0x20] sm:$0xff]
  %v986 = vld [vmem:[%s980 + $0x28] sm:$0xff]
  %v987 = vld [vmem:[%s980 + $0x30] sm:$0xff]
  %v988 = vld [vmem:[%s980 + $0x38] sm:$0xff]
  %v989 = vld [vmem:[%s980 + $0x40] sm:$0xff]
  %v990 = vld [vmem:[%s980 + $0x48] sm:$0xff]
  %v991 = vld [vmem:[%s980 + $0x50] sm:$0xff]
  %v992 = vld [vmem:[%s980 + $0x58] sm:$0xff]
  %v993 = vld [vmem:[%s980 + $0x60] sm:$0xff]
  %v994 = vld [vmem:[%s980 + $0x68] sm:$0xff]
  %v995 = vld [vmem:[%s980 + $0x70] sm:$0xff]
  %v996 = vld [vmem:[%s980 + $0x78] sm:$0xff]
  %v997 = vld [vmem:[%s980 + $0x80] sm:$0xff]
  %v998 = vld [vmem:[%s980 + $0x88] sm:$0xff]
  %v999 = vld [vmem:[%s980 + $0x90] sm:$0xff]
  %v1000 = vld [vmem:[%s980 + $0x98] sm:$0xff]
  %v1001 = vld [vmem:[%s980 + $0xa0] sm:$0xff]
  %v1002 = vld [vmem:[%s980 + $0xa8] sm:$0xff]
  %v1003 = vld [vmem:[%s980 + $0xb0] sm:$0xff]
  %v1004 = vld [vmem:[%s980 + $0xb8] sm:$0xff]
  %v1005 = vld [vmem:[%s980 + $0xc0] sm:$0xff]
  %v1006 = vld [vmem:[%s980 + $0xc8] sm:$0xff]
  %v1007 = vld [vmem:[%s980 + $0xd0] sm:$0xff]
  %v1008 = vld [vmem:[%s980 + $0xd8] sm:$0xff]
  %v1009 = vld [vmem:[%s980 + $0xe0] sm:$0xff]
  %v1010 = vld [vmem:[%s980 + $0xe8] sm:$0xff]
  %v1011 = vld [vmem:[%s980 + $0xf0] sm:$0xff]
  %v1012 = vld [vmem:[%s980 + $0xf8] sm:$0xff]
  %v1013 = vld [vmem:[%s980 + $0x100] sm:$0xff]
  %v1014 = vld [vmem:[%s980 + $0x108] sm:$0xff]
  %v1015 = vld [vmem:[%s980 + $0x110] sm:$0xff]
  %v1016 = vld [vmem:[%s980 + $0x118] sm:$0xff]
  %v1017 = vld [vmem:[%s980 + $0x120] sm:$0xff]
  %v1018 = vld [vmem:[%s980 + $0x128] sm:$0xff]
  %v1019 = vld [vmem:[%s980 + $0x130] sm:$0xff]
  %v1020 = vld [vmem:[%s980 + $0x138] sm:$0xff]
  %v1021 = vld [vmem:[%s980 + $0x140] sm:$0xff]
  %v1022 = vld [vmem:[%s980 + $0x148] sm:$0xff]
  %v1023 = vld [vmem:[%s980 + $0x150] sm:$0xff]
  %v1024 = vld [vmem:[%s980 + $0x158] sm:$0xff]
  %v1025 = vld [vmem:[%s980 + $0x160] sm:$0xff]
  %v1026 = vld [vmem:[%s980 + $0x168] sm:$0xff]
  %v1027 = vld [vmem:[%s980 + $0x170] sm:$0xff]
  %v1028 = vld [vmem:[%s980 + $0x178] sm:$0xff]
  %v1029 = vld [vmem:[%s980 + $0x180] sm:$0xff]
  %v1030 = vld [vmem:[%s980 + $0x188] sm:$0xff]
  %v1031 = vld [vmem:[%s980 + $0x190] sm:$0xff]
  %v1032 = vld [vmem:[%s980 + $0x198] sm:$0xff]
  %v1033 = vld [vmem:[%s980 + $0x1a0] sm:$0xff]
  %v1034 = vld [vmem:[%s980 + $0x1a8] sm:$0xff]
  %v1035 = vld [vmem:[%s980 + $0x1b0] sm:$0xff]
  %v1036 = vld [vmem:[%s980 + $0x1b8] sm:$0xff]
  %v1037 = vld [vmem:[%s980 + $0x1c0] sm:$0xff]
  %v1038 = vld [vmem:[%s980 + $0x1c8] sm:$0xff]
  %v1039 = vld [vmem:[%s980 + $0x1d0] sm:$0xff]
  %v1040 = vld [vmem:[%s980 + $0x1d8] sm:$0xff]
  %v1041 = vld [vmem:[%s980 + $0x1e0] sm:$0xff]
  %v1042 = vld [vmem:[%s980 + $0x1e8] sm:$0xff]
  %v1043 = vld [vmem:[%s980 + $0x1f0] sm:$0xff]
  %v1044 = vld [vmem:[%s980 + $0x1f8] sm:$0xff]
  %s1045 = scalar_lea.vmem %s2, 1024
  %v1046 = vld [vmem:[%s1045] sm:$0xff]
  %v1047 = vld [vmem:[%s1045 + $0x8] sm:$0xff]
  %v1048 = vld [vmem:[%s1045 + $0x10] sm:$0xff]
  %v1049 = vld [vmem:[%s1045 + $0x18] sm:$0xff]
  %v1050 = vld [vmem:[%s1045 + $0x20] sm:$0xff]
  %v1051 = vld [vmem:[%s1045 + $0x28] sm:$0xff]
  %v1052 = vld [vmem:[%s1045 + $0x30] sm:$0xff]
  %v1053 = vld [vmem:[%s1045 + $0x38] sm:$0xff]
  %v1054 = vld [vmem:[%s1045 + $0x40] sm:$0xff]
  %v1055 = vld [vmem:[%s1045 + $0x48] sm:$0xff]
  %v1056 = vld [vmem:[%s1045 + $0x50] sm:$0xff]
  %v1057 = vld [vmem:[%s1045 + $0x58] sm:$0xff]
  %v1058 = vld [vmem:[%s1045 + $0x60] sm:$0xff]
  %v1059 = vld [vmem:[%s1045 + $0x68] sm:$0xff]
  %v1060 = vld [vmem:[%s1045 + $0x70] sm:$0xff]
  %v1061 = vld [vmem:[%s1045 + $0x78] sm:$0xff]
  %v1062 = vld [vmem:[%s1045 + $0x80] sm:$0xff]
  %v1063 = vld [vmem:[%s1045 + $0x88] sm:$0xff]
  %v1064 = vld [vmem:[%s1045 + $0x90] sm:$0xff]
  %v1065 = vld [vmem:[%s1045 + $0x98] sm:$0xff]
  %v1066 = vld [vmem:[%s1045 + $0xa0] sm:$0xff]
  %v1067 = vld [vmem:[%s1045 + $0xa8] sm:$0xff]
  %v1068 = vld [vmem:[%s1045 + $0xb0] sm:$0xff]
  %v1069 = vld [vmem:[%s1045 + $0xb8] sm:$0xff]
  %v1070 = vld [vmem:[%s1045 + $0xc0] sm:$0xff]
  %v1071 = vld [vmem:[%s1045 + $0xc8] sm:$0xff]
  %v1072 = vld [vmem:[%s1045 + $0xd0] sm:$0xff]
  %v1073 = vld [vmem:[%s1045 + $0xd8] sm:$0xff]
  %v1074 = vld [vmem:[%s1045 + $0xe0] sm:$0xff]
  %v1075 = vld [vmem:[%s1045 + $0xe8] sm:$0xff]
  %v1076 = vld [vmem:[%s1045 + $0xf0] sm:$0xff]
  %v1077 = vld [vmem:[%s1045 + $0xf8] sm:$0xff]
  %v1078 = vld [vmem:[%s1045 + $0x100] sm:$0xff]
  %v1079 = vld [vmem:[%s1045 + $0x108] sm:$0xff]
  %v1080 = vld [vmem:[%s1045 + $0x110] sm:$0xff]
  %v1081 = vld [vmem:[%s1045 + $0x118] sm:$0xff]
  %v1082 = vld [vmem:[%s1045 + $0x120] sm:$0xff]
  %v1083 = vld [vmem:[%s1045 + $0x128] sm:$0xff]
  %v1084 = vld [vmem:[%s1045 + $0x130] sm:$0xff]
  %v1085 = vld [vmem:[%s1045 + $0x138] sm:$0xff]
  %v1086 = vld [vmem:[%s1045 + $0x140] sm:$0xff]
  %v1087 = vld [vmem:[%s1045 + $0x148] sm:$0xff]
  %v1088 = vld [vmem:[%s1045 + $0x150] sm:$0xff]
  %v1089 = vld [vmem:[%s1045 + $0x158] sm:$0xff]
  %v1090 = vld [vmem:[%s1045 + $0x160] sm:$0xff]
  %v1091 = vld [vmem:[%s1045 + $0x168] sm:$0xff]
  %v1092 = vld [vmem:[%s1045 + $0x170] sm:$0xff]
  %v1093 = vld [vmem:[%s1045 + $0x178] sm:$0xff]
  %v1094 = vld [vmem:[%s1045 + $0x180] sm:$0xff]
  %v1095 = vld [vmem:[%s1045 + $0x188] sm:$0xff]
  %v1096 = vld [vmem:[%s1045 + $0x190] sm:$0xff]
  %v1097 = vld [vmem:[%s1045 + $0x198] sm:$0xff]
  %v1098 = vld [vmem:[%s1045 + $0x1a0] sm:$0xff]
  %v1099 = vld [vmem:[%s1045 + $0x1a8] sm:$0xff]
  %v1100 = vld [vmem:[%s1045 + $0x1b0] sm:$0xff]
  %v1101 = vld [vmem:[%s1045 + $0x1b8] sm:$0xff]
  %v1102 = vld [vmem:[%s1045 + $0x1c0] sm:$0xff]
  %v1103 = vld [vmem:[%s1045 + $0x1c8] sm:$0xff]
  %v1104 = vld [vmem:[%s1045 + $0x1d0] sm:$0xff]
  %v1105 = vld [vmem:[%s1045 + $0x1d8] sm:$0xff]
  %v1106 = vld [vmem:[%s1045 + $0x1e0] sm:$0xff]
  %v1107 = vld [vmem:[%s1045 + $0x1e8] sm:$0xff]
  %v1108 = vld [vmem:[%s1045 + $0x1f0] sm:$0xff]
  %v1109 = vld [vmem:[%s1045 + $0x1f8] sm:$0xff]
  %1110 = vmatpush.msra.mxu0 %v1076
  %1111 = vmatpush.msra.mxu0 %v1074
  %1112 = vmatpush.msra.mxu0 %v1072
  %1113 = vmatpush.msra.mxu0 %v1070
  %1114 = vmatpush.msra.mxu0 %v1068
  %1115 = vmatpush.msra.mxu0 %v1066
  %1116 = vmatpush.msra.mxu0 %v1064
  %1117 = vmatpush.msra.mxu0 %v1062
  %1118 = vmatpush.msra.mxu0 %v1060
  %1119 = vmatpush.msra.mxu0 %v1058
  %1120 = vmatpush.msra.mxu0 %v1056
  %1121 = vmatpush.msra.mxu0 %v1054
  %1122 = vmatpush.msra.mxu0 %v1052
  %1123 = vmatpush.msra.mxu0 %v1050
  %1124 = vmatpush.msra.mxu0 %v1048
  %1125 = vmatpush.msra.mxu0 %v1046
  %1126 = vmatmul.f32.gmra.mxu0 %v791
  %v1127 = vpop.f32.mrf.mxu0
  %v1128 = vadd.f32 0.0, %v1127
  %1129 = vmatmul.f32.gmra.mxu0 %v793
  %v1130 = vpop.f32.mrf.mxu0
  %v1131 = vadd.f32 0.0, %v1130
  %1132 = vmatmul.f32.gmra.mxu0 %v795
  %v1133 = vpop.f32.mrf.mxu0
  %v1134 = vadd.f32 0.0, %v1133
  %1135 = vmatmul.f32.gmra.mxu0 %v797
  %v1136 = vpop.f32.mrf.mxu0
  %v1137 = vadd.f32 0.0, %v1136
  %1138 = vdwg.mxu0
  %1139 = vmatpush.msra.mxu0 %v1108
  %1140 = vmatpush.msra.mxu0 %v1106
  %1141 = vmatpush.msra.mxu0 %v1104
  %1142 = vmatpush.msra.mxu0 %v1102
  %1143 = vmatpush.msra.mxu0 %v1100
  %1144 = vmatpush.msra.mxu0 %v1098
  %1145 = vmatpush.msra.mxu0 %v1096
  %1146 = vmatpush.msra.mxu0 %v1094
  %1147 = vmatpush.msra.mxu0 %v1092
  %1148 = vmatpush.msra.mxu0 %v1090
  %1149 = vmatpush.msra.mxu0 %v1088
  %1150 = vmatpush.msra.mxu0 %v1086
  %1151 = vmatpush.msra.mxu0 %v1084
  %1152 = vmatpush.msra.mxu0 %v1082
  %1153 = vmatpush.msra.mxu0 %v1080
  %1154 = vmatpush.msra.mxu0 %v1078
  %1155 = vmatmul.f32.gmra.mxu0 %v792
  %v1156 = vpop.f32.mrf.mxu0
  %v1157 = vadd.f32 %v1128, %v1156
  %1158 = vmatmul.f32.gmra.mxu0 %v794
  %v1159 = vpop.f32.mrf.mxu0
  %v1160 = vadd.f32 %v1131, %v1159
  %1161 = vmatmul.f32.gmra.mxu0 %v796
  %v1162 = vpop.f32.mrf.mxu0
  %v1163 = vadd.f32 %v1134, %v1162
  %1164 = vmatmul.f32.gmra.mxu0 %v798
  %v1165 = vpop.f32.mrf.mxu0
  %v1166 = vadd.f32 %v1137, %v1165
  %1167 = vdwg.mxu0
  %1168 = vmatpush.msra.mxu0 %v1077
  %1169 = vmatpush.msra.mxu0 %v1075
  %1170 = vmatpush.msra.mxu0 %v1073
  %1171 = vmatpush.msra.mxu0 %v1071
  %1172 = vmatpush.msra.mxu0 %v1069
  %1173 = vmatpush.msra.mxu0 %v1067
  %1174 = vmatpush.msra.mxu0 %v1065
  %1175 = vmatpush.msra.mxu0 %v1063
  %1176 = vmatpush.msra.mxu0 %v1061
  %1177 = vmatpush.msra.mxu0 %v1059
  %1178 = vmatpush.msra.mxu0 %v1057
  %1179 = vmatpush.msra.mxu0 %v1055
  %1180 = vmatpush.msra.mxu0 %v1053
  %1181 = vmatpush.msra.mxu0 %v1051
  %1182 = vmatpush.msra.mxu0 %v1049
  %1183 = vmatpush.msra.mxu0 %v1047
  %1184 = vmatmul.f32.gmra.mxu0 %v791
  %v1185 = vpop.f32.mrf.mxu0
  %v1186 = vadd.f32 0.0, %v1185
  %1187 = vmatmul.f32.gmra.mxu0 %v793
  %v1188 = vpop.f32.mrf.mxu0
  %v1189 = vadd.f32 0.0, %v1188
  %1190 = vmatmul.f32.gmra.mxu0 %v795
  %v1191 = vpop.f32.mrf.mxu0
  %v1192 = vadd.f32 0.0, %v1191
  %1193 = vmatmul.f32.gmra.mxu0 %v797
  %v1194 = vpop.f32.mrf.mxu0
  %v1195 = vadd.f32 0.0, %v1194
  %1196 = vdwg.mxu0
  %1197 = vmatpush.msra.mxu0 %v1109
  %1198 = vmatpush.msra.mxu0 %v1107
  %1199 = vmatpush.msra.mxu0 %v1105
  %1200 = vmatpush.msra.mxu0 %v1103
  %1201 = vmatpush.msra.mxu0 %v1101
  %1202 = vmatpush.msra.mxu0 %v1099
  %1203 = vmatpush.msra.mxu0 %v1097
  %1204 = vmatpush.msra.mxu0 %v1095
  %1205 = vmatpush.msra.mxu0 %v1093
  %1206 = vmatpush.msra.mxu0 %v1091
  %1207 = vmatpush.msra.mxu0 %v1089
  %1208 = vmatpush.msra.mxu0 %v1087
  %1209 = vmatpush.msra.mxu0 %v1085
  %1210 = vmatpush.msra.mxu0 %v1083
  %1211 = vmatpush.msra.mxu0 %v1081
  %1212 = vmatpush.msra.mxu0 %v1079
  %1213 = vmatmul.f32.gmra.mxu0 %v792
  %v1214 = vpop.f32.mrf.mxu0
  %v1215 = vadd.f32 %v1186, %v1214
  %1216 = vmatmul.f32.gmra.mxu0 %v794
  %v1217 = vpop.f32.mrf.mxu0
  %v1218 = vadd.f32 %v1189, %v1217
  %1219 = vmatmul.f32.gmra.mxu0 %v796
  %v1220 = vpop.f32.mrf.mxu0
  %v1221 = vadd.f32 %v1192, %v1220
  %1222 = vmatmul.f32.gmra.mxu0 %v798
  %v1223 = vpop.f32.mrf.mxu0
  %v1224 = vadd.f32 %v1195, %v1223
  %1225 = vdwg.mxu0
  %1226 = vmatpush.msra.mxu0 0.0
  %1227 = vmatpush.msra.mxu0 0.0
  %1228 = vmatpush.msra.mxu0 0.0
  %1229 = vmatpush.msra.mxu0 0.0
  %1230 = vmatpush.msra.mxu0 0.0
  %1231 = vmatpush.msra.mxu0 0.0
  %1232 = vmatpush.msra.mxu0 0.0
  %1233 = vmatpush.msra.mxu0 0.0
  %1234 = vmatpush.msra.mxu0 0.0
  %1235 = vmatpush.msra.mxu0 0.0
  %1236 = vmatpush.msra.mxu0 0.0
  %1237 = vmatpush.msra.mxu0 0.0
  %1238 = vmatpush.msra.mxu0 %v920
  %1239 = vmatpush.msra.mxu0 %v917
  %1240 = vmatpush.msra.mxu0 %v914
  %1241 = vmatpush.msra.mxu0 %v911
  %1242 = vmatmul.f32.gmra.mxu0 %v315
  %v1243 = vpop.f32.mrf.mxu0
  %v1244 = vadd.f32 0.0, %v1243
  %1245 = vmatmul.f32.gmra.mxu0 %v318
  %v1246 = vpop.f32.mrf.mxu0
  %v1247 = vadd.f32 0.0, %v1246
  %1248 = vmatmul.f32.gmra.mxu0 %v321
  %v1249 = vpop.f32.mrf.mxu0
  %v1250 = vadd.f32 0.0, %v1249
  %1251 = vmatmul.f32.gmra.mxu0 %v324
  %v1252 = vpop.f32.mrf.mxu0
  %v1253 = vadd.f32 0.0, %v1252
  %1254 = vdwg.mxu0
  %1255 = vmatpush.msra.mxu0 0.0
  %1256 = vmatpush.msra.mxu0 0.0
  %1257 = vmatpush.msra.mxu0 0.0
  %1258 = vmatpush.msra.mxu0 0.0
  %1259 = vmatpush.msra.mxu0 0.0
  %1260 = vmatpush.msra.mxu0 0.0
  %1261 = vmatpush.msra.mxu0 0.0
  %1262 = vmatpush.msra.mxu0 0.0
  %1263 = vmatpush.msra.mxu0 0.0
  %1264 = vmatpush.msra.mxu0 0.0
  %1265 = vmatpush.msra.mxu0 0.0
  %1266 = vmatpush.msra.mxu0 0.0
  %1267 = vmatpush.msra.mxu0 %v978
  %1268 = vmatpush.msra.mxu0 %v975
  %1269 = vmatpush.msra.mxu0 %v972
  %1270 = vmatpush.msra.mxu0 %v969
  %1271 = vmatmul.f32.gmra.mxu0 %v315
  %v1272 = vpop.f32.mrf.mxu0
  %v1273 = vadd.f32 0.0, %v1272
  %1274 = vmatmul.f32.gmra.mxu0 %v318
  %v1275 = vpop.f32.mrf.mxu0
  %v1276 = vadd.f32 0.0, %v1275
  %1277 = vmatmul.f32.gmra.mxu0 %v321
  %v1278 = vpop.f32.mrf.mxu0
  %v1279 = vadd.f32 0.0, %v1278
  %1280 = vmatmul.f32.gmra.mxu0 %v324
  %v1281 = vpop.f32.mrf.mxu0
  %v1282 = vadd.f32 0.0, %v1281
  %1283 = vdwg.mxu0
  %1284 = vmatpush.msra.mxu0 %v1011
  %1285 = vmatpush.msra.mxu0 %v1009
  %1286 = vmatpush.msra.mxu0 %v1007
  %1287 = vmatpush.msra.mxu0 %v1005
  %1288 = vmatpush.msra.mxu0 %v1003
  %1289 = vmatpush.msra.mxu0 %v1001
  %1290 = vmatpush.msra.mxu0 %v999
  %1291 = vmatpush.msra.mxu0 %v997
  %1292 = vmatpush.msra.mxu0 %v995
  %1293 = vmatpush.msra.mxu0 %v993
  %1294 = vmatpush.msra.mxu0 %v991
  %1295 = vmatpush.msra.mxu0 %v989
  %1296 = vmatpush.msra.mxu0 %v987
  %1297 = vmatpush.msra.mxu0 %v985
  %1298 = vmatpush.msra.mxu0 %v983
  %1299 = vmatpush.msra.mxu0 %v981
  %1300 = vmatmul.f32.gmra.mxu0 %v791
  %v1301 = vpop.f32.mrf.mxu0
  %v1302 = vadd.f32 %v1244, %v1301
  %1303 = vmatmul.f32.gmra.mxu0 %v793
  %v1304 = vpop.f32.mrf.mxu0
  %v1305 = vadd.f32 %v1247, %v1304
  %1306 = vmatmul.f32.gmra.mxu0 %v795
  %v1307 = vpop.f32.mrf.mxu0
  %v1308 = vadd.f32 %v1250, %v1307
  %1309 = vmatmul.f32.gmra.mxu0 %v797
  %v1310 = vpop.f32.mrf.mxu0
  %v1311 = vadd.f32 %v1253, %v1310
  %1312 = vdwg.mxu0
  %1313 = vmatpush.msra.mxu0 %v1043
  %1314 = vmatpush.msra.mxu0 %v1041
  %1315 = vmatpush.msra.mxu0 %v1039
  %1316 = vmatpush.msra.mxu0 %v1037
  %1317 = vmatpush.msra.mxu0 %v1035
  %1318 = vmatpush.msra.mxu0 %v1033
  %1319 = vmatpush.msra.mxu0 %v1031
  %1320 = vmatpush.msra.mxu0 %v1029
  %1321 = vmatpush.msra.mxu0 %v1027
  %1322 = vmatpush.msra.mxu0 %v1025
  %1323 = vmatpush.msra.mxu0 %v1023
  %1324 = vmatpush.msra.mxu0 %v1021
  %1325 = vmatpush.msra.mxu0 %v1019
  %1326 = vmatpush.msra.mxu0 %v1017
  %1327 = vmatpush.msra.mxu0 %v1015
  %1328 = vmatpush.msra.mxu0 %v1013
  %1329 = vmatmul.f32.gmra.mxu0 %v792
  %v1330 = vpop.f32.mrf.mxu0
  %v1331 = vadd.f32 %v1302, %v1330
  %1332 = vmatmul.f32.gmra.mxu0 %v794
  %v1333 = vpop.f32.mrf.mxu0
  %v1334 = vadd.f32 %v1305, %v1333
  %1335 = vmatmul.f32.gmra.mxu0 %v796
  %v1336 = vpop.f32.mrf.mxu0
  %v1337 = vadd.f32 %v1308, %v1336
  %1338 = vmatmul.f32.gmra.mxu0 %v798
  %v1339 = vpop.f32.mrf.mxu0
  %v1340 = vadd.f32 %v1311, %v1339
  %1341 = vdwg.mxu0
  %1342 = vmatpush.msra.mxu0 %v1012
  %1343 = vmatpush.msra.mxu0 %v1010
  %1344 = vmatpush.msra.mxu0 %v1008
  %1345 = vmatpush.msra.mxu0 %v1006
  %1346 = vmatpush.msra.mxu0 %v1004
  %1347 = vmatpush.msra.mxu0 %v1002
  %1348 = vmatpush.msra.mxu0 %v1000
  %1349 = vmatpush.msra.mxu0 %v998
  %1350 = vmatpush.msra.mxu0 %v996
  %1351 = vmatpush.msra.mxu0 %v994
  %1352 = vmatpush.msra.mxu0 %v992
  %1353 = vmatpush.msra.mxu0 %v990
  %1354 = vmatpush.msra.mxu0 %v988
  %1355 = vmatpush.msra.mxu0 %v986
  %1356 = vmatpush.msra.mxu0 %v984
  %1357 = vmatpush.msra.mxu0 %v982
  %1358 = vmatmul.f32.gmra.mxu0 %v791
  %v1359 = vpop.f32.mrf.mxu0
  %v1360 = vadd.f32 %v1273, %v1359
  %1361 = vmatmul.f32.gmra.mxu0 %v793
  %v1362 = vpop.f32.mrf.mxu0
  %v1363 = vadd.f32 %v1276, %v1362
  %1364 = vmatmul.f32.gmra.mxu0 %v795
  %v1365 = vpop.f32.mrf.mxu0
  %v1366 = vadd.f32 %v1279, %v1365
  %1367 = vmatmul.f32.gmra.mxu0 %v797
  %v1368 = vpop.f32.mrf.mxu0
  %v1369 = vadd.f32 %v1282, %v1368
  %1370 = vdwg.mxu0
  %1371 = vmatpush.msra.mxu0 %v1044
  %1372 = vmatpush.msra.mxu0 %v1042
  %1373 = vmatpush.msra.mxu0 %v1040
  %1374 = vmatpush.msra.mxu0 %v1038
  %1375 = vmatpush.msra.mxu0 %v1036
  %1376 = vmatpush.msra.mxu0 %v1034
  %1377 = vmatpush.msra.mxu0 %v1032
  %1378 = vmatpush.msra.mxu0 %v1030
  %1379 = vmatpush.msra.mxu0 %v1028
  %1380 = vmatpush.msra.mxu0 %v1026
  %1381 = vmatpush.msra.mxu0 %v1024
  %1382 = vmatpush.msra.mxu0 %v1022
  %1383 = vmatpush.msra.mxu0 %v1020
  %1384 = vmatpush.msra.mxu0 %v1018
  %1385 = vmatpush.msra.mxu0 %v1016
  %1386 = vmatpush.msra.mxu0 %v1014
  %1387 = vmatmul.f32.gmra.mxu0 %v792
  %v1388 = vpop.f32.mrf.mxu0
  %v1389 = vadd.f32 %v1360, %v1388
  %1390 = vmatmul.f32.gmra.mxu0 %v794
  %v1391 = vpop.f32.mrf.mxu0
  %v1392 = vadd.f32 %v1363, %v1391
  %1393 = vmatmul.f32.gmra.mxu0 %v796
  %v1394 = vpop.f32.mrf.mxu0
  %v1395 = vadd.f32 %v1366, %v1394
  %1396 = vmatmul.f32.gmra.mxu0 %v798
  %v1397 = vpop.f32.mrf.mxu0
  %v1398 = vadd.f32 %v1369, %v1397
  %1399 = vdwg.mxu0
  %1400 = vmatpush.msra.mxu0 0.0
  %1401 = vmatpush.msra.mxu0 0.0
  %1402 = vmatpush.msra.mxu0 0.0
  %1403 = vmatpush.msra.mxu0 0.0
  %1404 = vmatpush.msra.mxu0 0.0
  %1405 = vmatpush.msra.mxu0 0.0
  %1406 = vmatpush.msra.mxu0 0.0
  %1407 = vmatpush.msra.mxu0 0.0
  %1408 = vmatpush.msra.mxu0 0.0
  %1409 = vmatpush.msra.mxu0 0.0
  %1410 = vmatpush.msra.mxu0 0.0
  %1411 = vmatpush.msra.mxu0 0.0
  %1412 = vmatpush.msra.mxu0 %v1166
  %1413 = vmatpush.msra.mxu0 %v1163
  %1414 = vmatpush.msra.mxu0 %v1160
  %1415 = vmatpush.msra.mxu0 %v1157
  %1416 = vmatmul.f32.gmra.mxu0 %v443
  %v1417 = vpop.f32.mrf.mxu0
  %v1418 = vadd.f32 0.0, %v1417
  %1419 = vmatmul.f32.gmra.mxu0 %v446
  %v1420 = vpop.f32.mrf.mxu0
  %v1421 = vadd.f32 0.0, %v1420
  %1422 = vmatmul.f32.gmra.mxu0 %v449
  %v1423 = vpop.f32.mrf.mxu0
  %v1424 = vadd.f32 0.0, %v1423
  %1425 = vmatmul.f32.gmra.mxu0 %v452
  %v1426 = vpop.f32.mrf.mxu0
  %v1427 = vadd.f32 0.0, %v1426
  %1428 = vdwg.mxu0
  %1429 = vmatpush.msra.mxu0 0.0
  %1430 = vmatpush.msra.mxu0 0.0
  %1431 = vmatpush.msra.mxu0 0.0
  %1432 = vmatpush.msra.mxu0 0.0
  %1433 = vmatpush.msra.mxu0 0.0
  %1434 = vmatpush.msra.mxu0 0.0
  %1435 = vmatpush.msra.mxu0 0.0
  %1436 = vmatpush.msra.mxu0 0.0
  %1437 = vmatpush.msra.mxu0 0.0
  %1438 = vmatpush.msra.mxu0 0.0
  %1439 = vmatpush.msra.mxu0 0.0
  %1440 = vmatpush.msra.mxu0 0.0
  %1441 = vmatpush.msra.mxu0 %v1224
  %1442 = vmatpush.msra.mxu0 %v1221
  %1443 = vmatpush.msra.mxu0 %v1218
  %1444 = vmatpush.msra.mxu0 %v1215
  %1445 = vmatmul.f32.gmra.mxu0 %v443
  %v1446 = vpop.f32.mrf.mxu0
  %v1447 = vadd.f32 0.0, %v1446
  %1448 = vmatmul.f32.gmra.mxu0 %v446
  %v1449 = vpop.f32.mrf.mxu0
  %v1450 = vadd.f32 0.0, %v1449
  %1451 = vmatmul.f32.gmra.mxu0 %v449
  %v1452 = vpop.f32.mrf.mxu0
  %v1453 = vadd.f32 0.0, %v1452
  %1454 = vmatmul.f32.gmra.mxu0 %v452
  %v1455 = vpop.f32.mrf.mxu0
  %v1456 = vadd.f32 0.0, %v1455
  %1457 = vdwg.mxu0
  %v1458 = vadd.f32 %v1331, %v1418
  %v1459 = vadd.f32 %v1389, %v1447
  %v1460 = vadd.f32 %v1334, %v1421
  %v1461 = vadd.f32 %v1392, %v1450
  %v1462 = vadd.f32 %v1337, %v1424
  %v1463 = vadd.f32 %v1395, %v1453
  %v1464 = vadd.f32 %v1340, %v1427
  %v1465 = vadd.f32 %v1398, %v1456
  %v1467 = vperm.slane %v799, 0
  %v1468 = vperm.slane %v799, 1
  %v1471 = vadd.f32 %v1458, %v1467
  %v1472 = vadd.f32 %v1459, %v1468
  %v1473 = vadd.f32 %v1460, %v1467
  %v1474 = vadd.f32 %v1461, %v1468
  %v1475 = vadd.f32 %v1462, %v1467
  %v1476 = vadd.f32 %v1463, %v1468
  %v1477 = vadd.f32 %v1464, %v1467
  %v1478 = vadd.f32 %v1465, %v1468
  %v1479 = vld [vmem:[%s12] sm:$0x1]
  %v1480 = vld [vmem:[%s13] sm:$0x1]
  %v1481 = vadd.f32 %v1471, %v1473
  %v1482 = vadd.f32 %v1481, %v1475
  %v1483 = vadd.f32 %v1482, %v1477
  %v1484 = vrot.slane %v1483, 4
  %v1485 = vadd.f32 %v1483, %v1484
  %v1486 = vrot.slane %v1485, 2
  %v1487 = vadd.f32 %v1485, %v1486
  %v1488 = vrot.slane %v1487, 1
  %v1489 = vadd.f32 %v1487, %v1488
  %v1490 = vadd.f32 %v1472, %v1474
  %v1491 = vadd.f32 %v1490, %v1476
  %v1492 = vadd.f32 %v1491, %v1478
  %v1493 = vrot.slane %v1492, 4
  %v1494 = vadd.f32 %v1492, %v1493
  %v1495 = vrot.slane %v1494, 2
  %v1496 = vadd.f32 %v1494, %v1495
  %v1497 = vrot.slane %v1496, 1
  %v1498 = vadd.f32 %v1496, %v1497
  %1499 = vmatpush.msra.mxu0 %v77
  %1500 = vmatpush.msra.mxu0 %v76
  %1501 = vmatpush.msra.mxu0 %v75
  %1502 = vmatpush.msra.mxu0 %v74
  %1503 = vmatpush.msra.mxu0 %v73
  %1504 = vmatpush.msra.mxu0 %v72
  %1505 = vmatpush.msra.mxu0 %v71
  %1506 = vmatpush.msra.mxu0 %v70
  %1507 = vmatpush.msra.mxu0 %v69
  %1508 = vmatpush.msra.mxu0 %v68
  %1509 = vmatpush.msra.mxu0 %v67
  %1510 = vmatpush.msra.mxu0 %v66
  %1511 = vmatpush.msra.mxu0 %v65
  %1512 = vmatpush.msra.mxu0 %v64
  %1513 = vmatpush.msra.mxu0 %v63
  %1514 = vmatpush.msra.mxu0 %v62
  %1515 = vmatmul.f32.gmra.mxu0 %v1489
  %v1516 = vpop.f32.mrf.mxu0
  %v1517 = vadd.f32 0.0, %v1516
  %1518 = vdwg.mxu0
  %1519 = vmatpush.msra.mxu0 %v93
  %1520 = vmatpush.msra.mxu0 %v92
  %1521 = vmatpush.msra.mxu0 %v91
  %1522 = vmatpush.msra.mxu0 %v90
  %1523 = vmatpush.msra.mxu0 %v89
  %1524 = vmatpush.msra.mxu0 %v88
  %1525 = vmatpush.msra.mxu0 %v87
  %1526 = vmatpush.msra.mxu0 %v86
  %1527 = vmatpush.msra.mxu0 %v85
  %1528 = vmatpush.msra.mxu0 %v84
  %1529 = vmatpush.msra.mxu0 %v83
  %1530 = vmatpush.msra.mxu0 %v82
  %1531 = vmatpush.msra.mxu0 %v81
  %1532 = vmatpush.msra.mxu0 %v80
  %1533 = vmatpush.msra.mxu0 %v79
  %1534 = vmatpush.msra.mxu0 %v78
  %1535 = vmatmul.f32.gmra.mxu0 %v1498
  %v1536 = vpop.f32.mrf.mxu0
  %v1537 = vadd.f32 %v1517, %v1536
  %1538 = vdwg.mxu0
  %v1539 = vmul.f32 %v1471, %v1471
  %v1540 = vmul.f32 %v1472, %v1472
  %v1541 = vmul.f32 %v1473, %v1473
  %v1542 = vmul.f32 %v1474, %v1474
  %v1543 = vmul.f32 %v1475, %v1475
  %v1544 = vmul.f32 %v1476, %v1476
  %v1545 = vmul.f32 %v1477, %v1477
  %v1546 = vmul.f32 %v1478, %v1478
  %v1547 = vadd.f32 %v1539, %v1541
  %v1548 = vadd.f32 %v1547, %v1543
  %v1549 = vadd.f32 %v1548, %v1545
  %v1550 = vrot.slane %v1549, 4
  %v1551 = vadd.f32 %v1549, %v1550
  %v1552 = vrot.slane %v1551, 2
  %v1553 = vadd.f32 %v1551, %v1552
  %v1554 = vrot.slane %v1553, 1
  %v1555 = vadd.f32 %v1553, %v1554
  %v1556 = vadd.f32 %v1540, %v1542
  %v1557 = vadd.f32 %v1556, %v1544
  %v1558 = vadd.f32 %v1557, %v1546
  %v1559 = vrot.slane %v1558, 4
  %v1560 = vadd.f32 %v1558, %v1559
  %v1561 = vrot.slane %v1560, 2
  %v1562 = vadd.f32 %v1560, %v1561
  %v1563 = vrot.slane %v1562, 1
  %v1564 = vadd.f32 %v1562, %v1563
  %1565 = vmatpush.msra.mxu0 %v77
  %1566 = vmatpush.msra.mxu0 %v76
  %1567 = vmatpush.msra.mxu0 %v75
  %1568 = vmatpush.msra.mxu0 %v74
  %1569 = vmatpush.msra.mxu0 %v73
  %1570 = vmatpush.msra.mxu0 %v72
  %1571 = vmatpush.msra.mxu0 %v71
  %1572 = vmatpush.msra.mxu0 %v70
  %1573 = vmatpush.msra.mxu0 %v69
  %1574 = vmatpush.msra.mxu0 %v68
  %1575 = vmatpush.msra.mxu0 %v67
  %1576 = vmatpush.msra.mxu0 %v66
  %1577 = vmatpush.msra.mxu0 %v65
  %1578 = vmatpush.msra.mxu0 %v64
  %1579 = vmatpush.msra.mxu0 %v63
  %1580 = vmatpush.msra.mxu0 %v62
  %1581 = vmatmul.f32.gmra.mxu0 %v1555
  %v1582 = vpop.f32.mrf.mxu0
  %v1583 = vadd.f32 0.0, %v1582
  %1584 = vdwg.mxu0
  %1585 = vmatpush.msra.mxu0 %v93
  %1586 = vmatpush.msra.mxu0 %v92
  %1587 = vmatpush.msra.mxu0 %v91
  %1588 = vmatpush.msra.mxu0 %v90
  %1589 = vmatpush.msra.mxu0 %v89
  %1590 = vmatpush.msra.mxu0 %v88
  %1591 = vmatpush.msra.mxu0 %v87
  %1592 = vmatpush.msra.mxu0 %v86
  %1593 = vmatpush.msra.mxu0 %v85
  %1594 = vmatpush.msra.mxu0 %v84
  %1595 = vmatpush.msra.mxu0 %v83
  %1596 = vmatpush.msra.mxu0 %v82
  %1597 = vmatpush.msra.mxu0 %v81
  %1598 = vmatpush.msra.mxu0 %v80
  %1599 = vmatpush.msra.mxu0 %v79
  %1600 = vmatpush.msra.mxu0 %v78
  %1601 = vmatmul.f32.gmra.mxu0 %v1564
  %v1602 = vpop.f32.mrf.mxu0
  %v1603 = vadd.f32 %v1583, %v1602
  %1604 = vdwg.mxu0
  %v1605 = vmul.f32 %v1537, %v665
  %v1606 = vmul.f32 %v1603, %v665
  %v1607 = vmul.f32 %v1605, %v1605
  %v1608 = vsub.f32 %v1606, %v1607
  %v1609 = vadd.f32 %v1608, 1e-05
  %v1610 = vrsqrt.pop %v1609
  %v1611 = vmul.f32 %v1610, %v1609
  %v1612 = vmul.f32 %v1611, %v1610
  %v1613 = vmul.f32 0.5, %v1612
  %v1614 = vsub.f32 1.5, %v1613
  %v1615 = vmul.f32 %v1610, %v1614
  %vm1616 = vweird.f32 %v1609
  %vm1617 = vweird.f32 %v1610
  %vm1618 = vmor %vm1616, %vm1617
  %v1619 = vsel %vm1618, %v1610, %v1615
  %v1620 = vmul.f32 %v1479, %v1619
  %v1621 = vmul.f32 %v1605, %v1620
  %v1622 = vsub.f32 %v1480, %v1621
  %v1624 = vsel %vm684, %v1620, 0
  %1626 = vmatpush.msra.mxu0 0.0
  %1627 = vmatpush.msra.mxu0 0.0
  %1628 = vmatpush.msra.mxu0 0.0
  %1629 = vmatpush.msra.mxu0 0.0
  %1630 = vmatpush.msra.mxu0 0.0
  %1631 = vmatpush.msra.mxu0 0.0
  %1632 = vmatpush.msra.mxu0 0.0
  %1633 = vmatpush.msra.mxu0 0.0
  %1634 = vmatpush.msra.mxu0 0.0
  %1635 = vmatpush.msra.mxu0 0.0
  %1636 = vmatpush.msra.mxu0 0.0
  %1637 = vmatpush.msra.mxu0 0.0
  %1638 = vmatpush.msra.mxu0 0.0
  %1639 = vmatpush.msra.mxu0 0.0
  %1640 = vmatpush.msra.mxu0 %v96
  %1641 = vmatpush.msra.mxu0 %v94
  %1642 = vmatmul.f32.gmra.mxu0 %v1624
  %v1643 = vpop.f32.mrf.mxu0
  %v1644 = vadd.f32 0.0, %v1643
  %1645 = vdwg.mxu0
  %1646 = vmatpush.msra.mxu0 0.0
  %1647 = vmatpush.msra.mxu0 0.0
  %1648 = vmatpush.msra.mxu0 0.0
  %1649 = vmatpush.msra.mxu0 0.0
  %1650 = vmatpush.msra.mxu0 0.0
  %1651 = vmatpush.msra.mxu0 0.0
  %1652 = vmatpush.msra.mxu0 0.0
  %1653 = vmatpush.msra.mxu0 0.0
  %1654 = vmatpush.msra.mxu0 0.0
  %1655 = vmatpush.msra.mxu0 0.0
  %1656 = vmatpush.msra.mxu0 0.0
  %1657 = vmatpush.msra.mxu0 0.0
  %1658 = vmatpush.msra.mxu0 0.0
  %1659 = vmatpush.msra.mxu0 0.0
  %1660 = vmatpush.msra.mxu0 %v97
  %1661 = vmatpush.msra.mxu0 %v95
  %1662 = vmatmul.f32.gmra.mxu0 %v1624
  %v1663 = vpop.f32.mrf.mxu0
  %v1664 = vadd.f32 0.0, %v1663
  %1665 = vdwg.mxu0
  %v1667 = vsel %vm684, %v1622, 0
  %1669 = vmatpush.msra.mxu0 0.0
  %1670 = vmatpush.msra.mxu0 0.0
  %1671 = vmatpush.msra.mxu0 0.0
  %1672 = vmatpush.msra.mxu0 0.0
  %1673 = vmatpush.msra.mxu0 0.0
  %1674 = vmatpush.msra.mxu0 0.0
  %1675 = vmatpush.msra.mxu0 0.0
  %1676 = vmatpush.msra.mxu0 0.0
  %1677 = vmatpush.msra.mxu0 0.0
  %1678 = vmatpush.msra.mxu0 0.0
  %1679 = vmatpush.msra.mxu0 0.0
  %1680 = vmatpush.msra.mxu0 0.0
  %1681 = vmatpush.msra.mxu0 0.0
  %1682 = vmatpush.msra.mxu0 0.0
  %1683 = vmatpush.msra.mxu0 %v96
  %1684 = vmatpush.msra.mxu0 %v94
  %1685 = vmatmul.f32.gmra.mxu0 %v1667
  %v1686 = vpop.f32.mrf.mxu0
  %v1687 = vadd.f32 0.0, %v1686
  %1688 = vdwg.mxu0
  %1689 = vmatpush.msra.mxu0 0.0
  %1690 = vmatpush.msra.mxu0 0.0
  %1691 = vmatpush.msra.mxu0 0.0
  %1692 = vmatpush.msra.mxu0 0.0
  %1693 = vmatpush.msra.mxu0 0.0
  %1694 = vmatpush.msra.mxu0 0.0
  %1695 = vmatpush.msra.mxu0 0.0
  %1696 = vmatpush.msra.mxu0 0.0
  %1697 = vmatpush.msra.mxu0 0.0
  %1698 = vmatpush.msra.mxu0 0.0
  %1699 = vmatpush.msra.mxu0 0.0
  %1700 = vmatpush.msra.mxu0 0.0
  %1701 = vmatpush.msra.mxu0 0.0
  %1702 = vmatpush.msra.mxu0 0.0
  %1703 = vmatpush.msra.mxu0 %v97
  %1704 = vmatpush.msra.mxu0 %v95
  %1705 = vmatmul.f32.gmra.mxu0 %v1667
  %v1706 = vpop.f32.mrf.mxu0
  %v1707 = vadd.f32 0.0, %v1706
  %1708 = vdwg.mxu0
  %v1709 = vperm.slane %v1644, 0
  %v1710 = vperm.slane %v1664, 0
  %v1711 = vmul.f32 %v1471, %v1709
  %v1712 = vmul.f32 %v1472, %v1710
  %v1713 = vmul.f32 %v1473, %v1709
  %v1714 = vmul.f32 %v1474, %v1710
  %v1715 = vmul.f32 %v1475, %v1709
  %v1716 = vmul.f32 %v1476, %v1710
  %v1717 = vmul.f32 %v1477, %v1709
  %v1718 = vmul.f32 %v1478, %v1710
  %v1719 = vperm.slane %v1687, 0
  %v1720 = vperm.slane %v1707, 0
  %v1721 = vadd.f32 %v1711, %v1719
  %v1722 = vadd.f32 %v1712, %v1720
  %v1723 = vadd.f32 %v1713, %v1719
  %v1724 = vadd.f32 %v1714, %v1720
  %v1725 = vadd.f32 %v1715, %v1719
  %v1726 = vadd.f32 %v1716, %v1720
  %v1727 = vadd.f32 %v1717, %v1719
  %v1728 = vadd.f32 %v1718, %v1720
  %v1729 = vmax.f32 %v1721, 0.0
  %v1730 = vmax.f32 %v1722, 0.0
  %v1731 = vmax.f32 %v1723, 0.0
  %v1732 = vmax.f32 %v1724, 0.0
  %v1733 = vmax.f32 %v1725, 0.0
  %v1734 = vmax.f32 %v1726, 0.0
  %v1735 = vmax.f32 %v1727, 0.0
  %v1736 = vmax.f32 %v1728, 0.0
  %v1737 = vld [vmem:[%s3] sm:$0xff]
  %v1738 = vld [vmem:[%s3 + $0x8] sm:$0xff]
  %v1739 = vld [vmem:[%s3 + $0x10] sm:$0xff]
  %v1740 = vld [vmem:[%s3 + $0x18] sm:$0xff]
  %v1741 = vld [vmem:[%s3 + $0x20] sm:$0xff]
  %v1742 = vld [vmem:[%s3 + $0x28] sm:$0xff]
  %v1743 = vld [vmem:[%s3 + $0x30] sm:$0xff]
  %v1744 = vld [vmem:[%s3 + $0x38] sm:$0xff]
  %v1745 = vld [vmem:[%s3 + $0x40] sm:$0xff]
  %v1746 = vld [vmem:[%s3 + $0x48] sm:$0xff]
  %v1747 = vld [vmem:[%s3 + $0x50] sm:$0xff]
  %v1748 = vld [vmem:[%s3 + $0x58] sm:$0xff]
  %v1749 = vld [vmem:[%s3 + $0x60] sm:$0xff]
  %v1750 = vld [vmem:[%s3 + $0x68] sm:$0xff]
  %v1751 = vld [vmem:[%s3 + $0x70] sm:$0xff]
  %v1752 = vld [vmem:[%s3 + $0x78] sm:$0xff]
  %v1753 = vld [vmem:[%s3 + $0x80] sm:$0xff]
  %v1754 = vld [vmem:[%s3 + $0x88] sm:$0xff]
  %v1755 = vld [vmem:[%s3 + $0x90] sm:$0xff]
  %v1756 = vld [vmem:[%s3 + $0x98] sm:$0xff]
  %v1757 = vld [vmem:[%s3 + $0xa0] sm:$0xff]
  %v1758 = vld [vmem:[%s3 + $0xa8] sm:$0xff]
  %v1759 = vld [vmem:[%s3 + $0xb0] sm:$0xff]
  %v1760 = vld [vmem:[%s3 + $0xb8] sm:$0xff]
  %v1761 = vld [vmem:[%s3 + $0xc0] sm:$0xff]
  %v1762 = vld [vmem:[%s3 + $0xc8] sm:$0xff]
  %v1763 = vld [vmem:[%s3 + $0xd0] sm:$0xff]
  %v1764 = vld [vmem:[%s3 + $0xd8] sm:$0xff]
  %v1765 = vld [vmem:[%s3 + $0xe0] sm:$0xff]
  %v1766 = vld [vmem:[%s3 + $0xe8] sm:$0xff]
  %v1767 = vld [vmem:[%s3 + $0xf0] sm:$0xff]
  %v1768 = vld [vmem:[%s3 + $0xf8] sm:$0xff]
  %v1769 = vld [vmem:[%s14] sm:$0x3]
  %v1771 = vperm.slane %v1769, 0
  %v1772 = vperm.slane %v1769, 1
  %1775 = vmatpush.msra.mxu0 %v1767
  %1776 = vmatpush.msra.mxu0 %v1765
  %1777 = vmatpush.msra.mxu0 %v1763
  %1778 = vmatpush.msra.mxu0 %v1761
  %1779 = vmatpush.msra.mxu0 %v1759
  %1780 = vmatpush.msra.mxu0 %v1757
  %1781 = vmatpush.msra.mxu0 %v1755
  %1782 = vmatpush.msra.mxu0 %v1753
  %1783 = vmatpush.msra.mxu0 %v1751
  %1784 = vmatpush.msra.mxu0 %v1749
  %1785 = vmatpush.msra.mxu0 %v1747
  %1786 = vmatpush.msra.mxu0 %v1745
  %1787 = vmatpush.msra.mxu0 %v1743
  %1788 = vmatpush.msra.mxu0 %v1741
  %1789 = vmatpush.msra.mxu0 %v1739
  %1790 = vmatpush.msra.mxu0 %v1737
  %1791 = vmatmul.f32.gmra.mxu0 %v50
  %v1792 = vpop.f32.mrf.mxu0
  %v1793 = vadd.f32 %v1771, %v1792
  %1794 = vmatmul.f32.gmra.mxu0 %v51
  %v1795 = vpop.f32.mrf.mxu0
  %v1796 = vadd.f32 %v1771, %v1795
  %1797 = vmatmul.f32.gmra.mxu0 %v52
  %v1798 = vpop.f32.mrf.mxu0
  %v1799 = vadd.f32 %v1771, %v1798
  %1800 = vmatmul.f32.gmra.mxu0 %v53
  %v1801 = vpop.f32.mrf.mxu0
  %v1802 = vadd.f32 %v1771, %v1801
  %1803 = vdwg.mxu0
  %1804 = vmatpush.msra.mxu0 %v1768
  %1805 = vmatpush.msra.mxu0 %v1766
  %1806 = vmatpush.msra.mxu0 %v1764
  %1807 = vmatpush.msra.mxu0 %v1762
  %1808 = vmatpush.msra.mxu0 %v1760
  %1809 = vmatpush.msra.mxu0 %v1758
  %1810 = vmatpush.msra.mxu0 %v1756
  %1811 = vmatpush.msra.mxu0 %v1754
  %1812 = vmatpush.msra.mxu0 %v1752
  %1813 = vmatpush.msra.mxu0 %v1750
  %1814 = vmatpush.msra.mxu0 %v1748
  %1815 = vmatpush.msra.mxu0 %v1746
  %1816 = vmatpush.msra.mxu0 %v1744
  %1817 = vmatpush.msra.mxu0 %v1742
  %1818 = vmatpush.msra.mxu0 %v1740
  %1819 = vmatpush.msra.mxu0 %v1738
  %1820 = vmatmul.f32.gmra.mxu0 %v50
  %v1821 = vpop.f32.mrf.mxu0
  %v1822 = vadd.f32 %v1772, %v1821
  %1823 = vmatmul.f32.gmra.mxu0 %v51
  %v1824 = vpop.f32.mrf.mxu0
  %v1825 = vadd.f32 %v1772, %v1824
  %1826 = vmatmul.f32.gmra.mxu0 %v52
  %v1827 = vpop.f32.mrf.mxu0
  %v1828 = vadd.f32 %v1772, %v1827
  %1829 = vmatmul.f32.gmra.mxu0 %v53
  %v1830 = vpop.f32.mrf.mxu0
  %v1831 = vadd.f32 %v1772, %v1830
  %1832 = vdwg.mxu0
  %v1833 = vadd.f32 %v1729, %v1793
  %v1834 = vadd.f32 %v1730, %v1822
  %v1835 = vadd.f32 %v1731, %v1796
  %v1836 = vadd.f32 %v1732, %v1825
  %v1837 = vadd.f32 %v1733, %v1799
  %v1838 = vadd.f32 %v1734, %v1828
  %v1839 = vadd.f32 %v1735, %v1802
  %v1840 = vadd.f32 %v1736, %v1831
  %1841 = vst [vmem:[%s15] sm:$0xff] %v1833
  %1842 = vst [vmem:[%s15 + $0x8] sm:$0xff] %v1834
  %1843 = vst [vmem:[%s15 + $0x10] sm:$0xff] %v1835
  %1844 = vst [vmem:[%s15 + $0x18] sm:$0xff] %v1836
  %1845 = vst [vmem:[%s15 + $0x20] sm:$0xff] %v1837
  %1846 = vst [vmem:[%s15 + $0x28] sm:$0xff] %v1838
  %1847 = vst [vmem:[%s15 + $0x30] sm:$0xff] %v1839
  %1848 = vst [vmem:[%s15 + $0x38] sm:$0xff] %v1840
  // Predicated region
  $region62: #{decoder_block_forward.1} parent=0 // pred_check
    _
  $region63: #{decoder_block_forward.1} parent=0 // pred_check_branch
    %1850 = sbr.rel (0) target = $region65
  $region64: #{decoder_block_forward.1} parent=0 // pred_region
    _
  $region65: #{decoder_block_forward.1} parent=0 // pred_fallthru
    _
  // Predicated region
  $region66: #{decoder_block_forward.1} parent=0 // pred_check
    _
  $region67: #{decoder_block_forward.1} parent=0 // pred_check_branch
    %1852 = sbr.rel (0) target = $region69
  $region68: #{decoder_block_forward.1} parent=0 // pred_region
    _
  $region69: #{decoder_block_forward.1} parent=0 // pred_fallthru
    _

</llo_original>
